<compile_context>
chip_gen: v6e
topology: v6e:2x2x1
jax: 0.10.0
libtpu: 0.0.40
codegen_flags: <defaults>
</compile_context>

<pallas_src>
import functools

import jax
import jax.numpy as jnp
from jax import lax
from jax.experimental import pallas as pl
from jax.experimental.pallas import tpu as pltpu


# ----------------------------------------------------------------------------
# In-kernel helpers (traced inside the Pallas body; shapes are static)
# ----------------------------------------------------------------------------
def _lstm_cell(gates, c):
    """LSTM cell update. gates: (B, 4W) pre-activations in [i|f|g|o] blocks of
    width W = c.shape[-1].  Works for a single direction (W=H) and for the
    merged bidirectional state (W=2H, per-gate blocks laid out [fwd|bwd])."""
    W = c.shape[-1]
    # Full-width transcendentals once (EUP slot is otherwise idle), then slice.
    sg = jax.nn.sigmoid(gates)
    tg = jnp.tanh(gates)
    i_g = sg[:, 0 * W:1 * W]
    f_g = sg[:, 1 * W:2 * W]
    g_g = tg[:, 2 * W:3 * W]
    o_g = sg[:, 3 * W:4 * W]
    c_new = f_g * c + i_g * g_g
    h_new = o_g * jnp.tanh(c_new)
    return h_new, c_new


# ----------------------------------------------------------------------------
# Fused forward kernel: 2-layer bidirectional LSTM + final Linear
# ----------------------------------------------------------------------------
def _fused_kernel(x_ref, w0_ref, w1_ref, b_ref, out_ref, *, T, B, H, C, Dp):
    f32, bf16 = jnp.float32, jnp.bfloat16
    H2, H4, H8 = 2 * H, 4 * H, 8 * H

    # ---- parameter slab views (static, tile-aligned slices of VMEM refs) ----
    wih0 = w0_ref[0:Dp, :]                       # (Dp, 8H) bf16
    whh0 = w0_ref[Dp:Dp + H2, :]                 # (2H, 8H) bf16, block-diagonal
    wih1f = w1_ref[0:H2, :]                      # (2H, 4H) bf16
    whh1f = w1_ref[H2:H2 + H, :]                 # (H, 4H)  bf16
    wih1b = w1_ref[H2 + H:2 * H2 + H, :]         # (2H, 4H) bf16
    wfc = w1_ref[2 * H2 + H:3 * H2 + H, :]       # (2H, 4H) bf16 (cols 0:C real)
    b0 = b_ref[0:1, :]                           # (1, 8H) f32
    b1f = b_ref[1:2, 0:H4]                       # (1, 4H) f32
    b1b = b_ref[2:3, 0:H4]
    bfc = b_ref[3:4, 0:H4]

    # ---- layer 0: ONE hoisted input projection for both directions ----------
    # Row block i of xp0 = [fwd-gate preacts at t=i | bwd-gate preacts at t=T-1-i]
    xp0 = jnp.dot(x_ref[...], wih0, preferred_element_type=f32) + b0   # (T*B, 8H)

    # ---- layer 0: merged fwd+bwd recurrence, one matmul per unrolled step ----
    s = jnp.zeros((B, H2), f32)                  # [h_fwd | h_bwd]
    c = jnp.zeros((B, H2), f32)                  # [c_fwd | c_bwd]
    s_hist = []                                  # per-step states held in vregs
    for i in range(T):
        xb = xp0[i * B:(i + 1) * B, :]
        if i == 0:                               # zero initial state: skip s@Whh
            gates = xb
        else:
            gates = xb + jnp.dot(s.astype(bf16), whh0,
                                 preferred_element_type=f32)
        s, c = _lstm_cell(gates, c)
        s_hist.append(s)

    # Layer-0 output sequence out0[t] = [h_fwd[t] | h_bwd[t]], reassembled from
    # the merged-loop states (fwd half of iter t, bwd half of iter T-1-t).
    out0 = jnp.concatenate(
        [jnp.concatenate([s_hist[t][:, 0:H], s_hist[T - 1 - t][:, H:H2]], axis=1)
         for t in range(T)], axis=0).astype(bf16)                    # (T*B, 2H)

    # ---- layer 1 forward: hoisted input projection + recurrence --------------
    xp1 = jnp.dot(out0, wih1f, preferred_element_type=f32) + b1f     # (T*B, 4H)
    h1 = None
    c1 = jnp.zeros((B, H), f32)
    for t in range(T):
        xb = xp1[t * B:(t + 1) * B, :]
        if t == 0:
            gates = xb
        else:
            gates = xb + jnp.dot(h1.astype(bf16), whh1f,
                                 preferred_element_type=f32)
        h1, c1 = _lstm_cell(gates, c1)
    h1f_T = h1

    # ---- layer 1 backward: only its state at t=T-1 is consumed, which is its
    # first processed step from zero initial state -> a single cell. -----------
    g1b = (jnp.dot(out0[(T - 1) * B:T * B, :], wih1b,
                   preferred_element_type=f32) + b1b)
    h1b_T, _ = _lstm_cell(g1b, jnp.zeros((B, H), f32))

    # ---- final Linear on concat(h1f_T, h1b_T) --------------------------------
    h_cat = jnp.concatenate([h1f_T, h1b_T], axis=1).astype(bf16)     # (B, 2H)
    logits = jnp.dot(h_cat, wfc, preferred_element_type=f32) + bfc   # (B, 4H)
    out_ref[...] = logits[:, 0:C]


_VMEM_SPEC = pl.BlockSpec(memory_space=pltpu.MemorySpace.VMEM)


# ----------------------------------------------------------------------------
# Host-side parameter packing: 14 tiny arrays -> 3 slabs (done once)
# ----------------------------------------------------------------------------
def pack_params(params, input_size):
    l0f, l0b = params["lstm"][0]
    l1f, l1b = params["lstm"][1]
    H = l0f["whh_t"].shape[0]
    C = params["fc_w_t"].shape[1]
    D = input_size
    H2, H4, H8 = 2 * H, 4 * H, 8 * H
    assert H % 8 == 0 and C <= H4
    Dp = max(8, -(-2 * D // 8) * 8)              # padded row count for W_ih slab

    def interleave(wf, wb):
        # (rows, 4H) x2 -> (rows, 8H) with per-gate [fwd | bwd] column blocks.
        cols = []
        for k in range(4):
            cols.append(wf[:, k * H:(k + 1) * H])
            cols.append(wb[:, k * H:(k + 1) * H])
        return jnp.concatenate(cols, axis=1)

    z = jnp.zeros
    # Layer-0 input weight: rows 0:D read x[t=i], rows D:2D read x[t=T-1-i].
    wih0 = z((Dp, H8), jnp.float32)
    wih0 = wih0.at[0:D, :].set(interleave(l0f["wih_t"], z((D, H4))))
    wih0 = wih0.at[D:2 * D, :].set(interleave(z((D, H4)), l0b["wih_t"]))
    # Layer-0 block-diagonal recurrent weight: rows 0:H <- h_fwd, H:2H <- h_bwd.
    whh0 = z((H2, H8), jnp.float32)
    whh0 = whh0.at[0:H, :].set(interleave(l0f["whh_t"], z((H, H4))))
    whh0 = whh0.at[H:H2, :].set(interleave(z((H, H4)), l0b["whh_t"]))
    w0 = jnp.concatenate([wih0, whh0], axis=0).astype(jnp.bfloat16)

    # Layer-1 + fc slab (lane width 4H); all row offsets are multiples of 8.
    wfc_pad = z((H2, H4), jnp.float32).at[:, 0:C].set(params["fc_w_t"])
    w1 = jnp.concatenate([l1f["wih_t"], l1f["whh_t"], l1b["wih_t"], wfc_pad],
                         axis=0).astype(jnp.bfloat16)

    # f32 bias slab (biases stay full precision; added after f32 accumulation).
    b = z((8, H8), jnp.float32)
    b = b.at[0, :].set(interleave(l0f["b"], l0b["b"])[0])
    b = b.at[1, 0:H4].set(l1f["b"][0])
    b = b.at[2, 0:H4].set(l1b["b"][0])
    b = b.at[3, 0:C].set(params["fc_b"][0])

    return {"w0": w0, "w1": w1, "b": b, "H": H, "C": C, "Dp": Dp, "D": D}


def stroke_lstm_forward(x, packed):
    """x: (B, T, input_size) -> logits (B, num_classes). Single fused kernel."""
    B, T, D = x.shape
    H, C, Dp = packed["H"], packed["C"], packed["Dp"]

    # Pair x[t=i] with x[t=T-1-i] along features, time-major flatten, pad cols.
    x_tm = jnp.transpose(x, (1, 0, 2)).astype(jnp.float32)          # (T, B, D)
    x_pair = jnp.concatenate([x_tm, x_tm[::-1]], axis=-1)           # (T, B, 2D)
    x2 = x_pair.reshape(T * B, 2 * D)
    if Dp > 2 * D:
        x2 = jnp.pad(x2, ((0, 0), (0, Dp - 2 * D)))
    x2 = x2.astype(jnp.bfloat16)

    kernel = functools.partial(_fused_kernel, T=T, B=B, H=H, C=C, Dp=Dp)
    return pl.pallas_call(
        kernel,
        out_shape=jax.ShapeDtypeStruct((B, C), jnp.float32),
        in_specs=[_VMEM_SPEC] * 4,
        out_specs=_VMEM_SPEC,
    )(x2, packed["w0"], packed["w1"], packed["b"])
    # TODO(synk): nn.Dropout / inter-layer LSTM dropout are identity at
    # inference; training-mode stochastic masking is not reproduced here.


# ----------------------------------------------------------------------------
# Deterministic parameter init (PyTorch-style uniform(-1/sqrt(H), 1/sqrt(H)))
# ----------------------------------------------------------------------------
def init_params(key, input_size=3, hidden_size=32, num_layers=2,
                num_classes=10, bidirectional=True):
    num_dirs = 2 if bidirectional else 1
    bound = hidden_size ** -0.5
    n_keys = num_layers * num_dirs * 4 + 2
    keys = list(jax.random.split(key, n_keys))
    ki = 0

    def u(shape):
        nonlocal ki
        k = keys[ki]
        ki += 1
        return jax.random.uniform(k, shape, jnp.float32, -bound, bound)

    layers = []
    for l in range(num_layers):
        d_in = input_size if l == 0 else hidden_size * num_dirs
        dirs = []
        for _ in range(num_dirs):
            wih = u((4 * hidden_size, d_in))
            whh = u((4 * hidden_size, hidden_size))
            bih = u((4 * hidden_size,))
            bhh = u((4 * hidden_size,))
            dirs.append({"wih_t": wih.T, "whh_t": whh.T,
                         "b": (bih + bhh)[None, :]})
        layers.append(dirs)

    fc_w = u((num_classes, hidden_size * num_dirs))
    fc_b = u((num_classes,))
    return {"lstm": layers, "fc_w_t": fc_w.T, "fc_b": fc_b[None, :]}


# ----------------------------------------------------------------------------
# Pure-JAX f32 reference (full recurrences, lax.scan) for a correctness check
# ----------------------------------------------------------------------------
def _ref_forward(x, params):
    inp = jnp.transpose(x, (1, 0, 2)).astype(jnp.float32)
    for layer in params["lstm"]:
        outs = []
        for d, p in enumerate(layer):
            xin = inp if d == 0 else jnp.flip(inp, axis=0)
            H = p["whh_t"].shape[0]
            B = xin.shape[1]

            def step(carry, x_t, p=p, H=H):
                h, c = carry
                g = x_t @ p["wih_t"] + h @ p["whh_t"] + p["b"]
                i_g = jax.nn.sigmoid(g[:, 0 * H:1 * H])
                f_g = jax.nn.sigmoid(g[:, 1 * H:2 * H])
                g_g = jnp.tanh(g[:, 2 * H:3 * H])
                o_g = jax.nn.sigmoid(g[:, 3 * H:4 * H])
                c = f_g * c + i_g * g_g
                h = o_g * jnp.tanh(c)
                return (h, c), h

            init = (jnp.zeros((B, H), jnp.float32),
                    jnp.zeros((B, H), jnp.float32))
            _, h_seq = lax.scan(step, init, xin)
            if d == 1:
                h_seq = jnp.flip(h_seq, axis=0)
            outs.append(h_seq)
        inp = jnp.concatenate(outs, axis=-1)
    return inp[-1] @ params["fc_w_t"] + params["fc_b"]


# ----------------------------------------------------------------------------
if __name__ == "__main__":
    B, T, INPUT = 2, 8, 3
    HIDDEN, LAYERS, CLASSES = 32, 2, 10

    key = jax.random.PRNGKey(0)
    k_x, k_p = jax.random.split(key)
    x = jax.random.normal(k_x, (B, T, INPUT), jnp.float32)
    params = init_params(k_p, input_size=INPUT, hidden_size=HIDDEN,
                         num_layers=LAYERS, num_classes=CLASSES,
                         bidirectional=True)
    packed = pack_params(params, INPUT)

    logits = stroke_lstm_forward(x, packed)
    logits = jax.block_until_ready(logits)

    ref = jax.block_until_ready(_ref_forward(x, params))
    assert logits.shape == (B, CLASSES), logits.shape
    assert bool(jnp.all(jnp.isfinite(logits)))
    # Tolerance accounts for bf16 MXU operands (f32 accumulation, f32 gates).
    assert bool(jnp.allclose(logits, ref, rtol=2e-2, atol=2e-2)), (
        "mismatch vs pure-JAX reference")

    print("KERNEL_OK")
</pallas_src>

<mosaic_0001>
module attributes {stable_mosaic.version = 11 : i64} {
  func.func @_fused_kernel(%arg0: memref<16x8xbf16, #tpu.memory_space<vmem>>, %arg1: memref<72x256xbf16, #tpu.memory_space<vmem>>, %arg2: memref<224x128xbf16, #tpu.memory_space<vmem>>, %arg3: memref<8x256xf32, #tpu.memory_space<vmem>>, %arg4: memref<2x10xf32, #tpu.memory_space<vmem>>) attributes {dimension_semantics = [], scalar_prefetch = 0 : i64, scratch_operands = 0 : i64, tpu.core_type = #tpu.core_type<tc>} {
    %c0 = arith.constant 0 : index
    %c0_0 = arith.constant 0 : index
    %0 = vector.load %arg1[%c0, %c0_0] : memref<72x256xbf16, #tpu.memory_space<vmem>>, vector<8x256xbf16>
    %c8 = arith.constant 8 : index
    %c0_1 = arith.constant 0 : index
    %1 = vector.load %arg1[%c8, %c0_1] : memref<72x256xbf16, #tpu.memory_space<vmem>>, vector<64x256xbf16>
    %c0_2 = arith.constant 0 : index
    %c0_3 = arith.constant 0 : index
    %2 = vector.load %arg2[%c0_2, %c0_3] : memref<224x128xbf16, #tpu.memory_space<vmem>>, vector<64x128xbf16>
    %c64 = arith.constant 64 : index
    %c0_4 = arith.constant 0 : index
    %3 = vector.load %arg2[%c64, %c0_4] : memref<224x128xbf16, #tpu.memory_space<vmem>>, vector<32x128xbf16>
    %c96 = arith.constant 96 : index
    %c0_5 = arith.constant 0 : index
    %4 = vector.load %arg2[%c96, %c0_5] : memref<224x128xbf16, #tpu.memory_space<vmem>>, vector<64x128xbf16>
    %c160 = arith.constant 160 : index
    %c0_6 = arith.constant 0 : index
    %5 = vector.load %arg2[%c160, %c0_6] : memref<224x128xbf16, #tpu.memory_space<vmem>>, vector<64x128xbf16>
    %c0_7 = arith.constant 0 : index
    %c0_8 = arith.constant 0 : index
    %6 = vector.load %arg3[%c0_7, %c0_8] : memref<8x256xf32, #tpu.memory_space<vmem>>, vector<1x256xf32>
    %c1 = arith.constant 1 : index
    %c0_9 = arith.constant 0 : index
    %7 = vector.load %arg3[%c1, %c0_9] : memref<8x256xf32, #tpu.memory_space<vmem>>, vector<1x128xf32>
    %c2 = arith.constant 2 : index
    %c0_10 = arith.constant 0 : index
    %8 = vector.load %arg3[%c2, %c0_10] : memref<8x256xf32, #tpu.memory_space<vmem>>, vector<1x128xf32>
    %c3 = arith.constant 3 : index
    %c0_11 = arith.constant 0 : index
    %9 = vector.load %arg3[%c3, %c0_11] : memref<8x256xf32, #tpu.memory_space<vmem>>, vector<1x128xf32>
    %c0_12 = arith.constant 0 : index
    %c0_13 = arith.constant 0 : index
    %10 = vector.load %arg0[%c0_12, %c0_13] : memref<16x8xbf16, #tpu.memory_space<vmem>>, vector<16x8xbf16>
    %cst = arith.constant dense<0.000000e+00> : vector<16x256xf32>
    %11 = tpu.matmul %10, %0, %cst {dimension_numbers = #tpu.dot_dimension_numbers<[1], [0], [0], [1], [0, 0, 1, 1], [], []>} : vector<16x8xbf16>, vector<8x256xbf16>, vector<16x256xf32> -> vector<16x256xf32>
    %12 = vector.broadcast %6 : vector<1x256xf32> to vector<16x256xf32>
    %13 = arith.addf %11, %12 : vector<16x256xf32>
    %cst_14 = arith.constant 0.000000e+00 : f32
    %14 = vector.broadcast %cst_14 : f32 to vector<2x64xf32>
    %15 = vector.extract_strided_slice %13 {offsets = [0, 0], sizes = [2, 256], strides = [1, 1]} : vector<16x256xf32> to vector<2x256xf32>
    %16 = arith.negf %15 : vector<2x256xf32>
    %17 = math.exp %16 : vector<2x256xf32>
    %cst_15 = arith.constant 1.000000e+00 : f32
    %18 = vector.broadcast %cst_15 : f32 to vector<2x256xf32>
    %19 = arith.addf %18, %17 : vector<2x256xf32>
    %20 = arith.divf %18, %19 : vector<2x256xf32>
    %21 = math.tanh %15 : vector<2x256xf32>
    %22 = vector.extract_strided_slice %20 {offsets = [0, 0], sizes = [2, 64], strides = [1, 1]} : vector<2x256xf32> to vector<2x64xf32>
    %23 = vector.extract_strided_slice %20 {offsets = [0, 64], sizes = [2, 64], strides = [1, 1]} : vector<2x256xf32> to vector<2x64xf32>
    %24 = vector.extract_strided_slice %21 {offsets = [0, 128], sizes = [2, 64], strides = [1, 1]} : vector<2x256xf32> to vector<2x64xf32>
    %25 = vector.extract_strided_slice %20 {offsets = [0, 192], sizes = [2, 64], strides = [1, 1]} : vector<2x256xf32> to vector<2x64xf32>
    %26 = arith.mulf %23, %14 : vector<2x64xf32>
    %27 = arith.mulf %22, %24 : vector<2x64xf32>
    %28 = arith.addf %26, %27 : vector<2x64xf32>
    %29 = math.tanh %28 : vector<2x64xf32>
    %30 = arith.mulf %25, %29 : vector<2x64xf32>
    %31 = vector.extract_strided_slice %13 {offsets = [2, 0], sizes = [2, 256], strides = [1, 1]} : vector<16x256xf32> to vector<2x256xf32>
    %32 = arith.truncf %30 : vector<2x64xf32> to vector<2x64xbf16>
    %cst_16 = arith.constant dense<0.000000e+00> : vector<2x256xf32>
    %33 = tpu.matmul %32, %1, %cst_16 {dimension_numbers = #tpu.dot_dimension_numbers<[1], [0], [0], [1], [0, 0, 1, 1], [], []>} : vector<2x64xbf16>, vector<64x256xbf16>, vector<2x256xf32> -> vector<2x256xf32>
    %34 = arith.addf %31, %33 : vector<2x256xf32>
    %35 = arith.negf %34 : vector<2x256xf32>
    %36 = math.exp %35 : vector<2x256xf32>
    %cst_17 = arith.constant 1.000000e+00 : f32
    %37 = vector.broadcast %cst_17 : f32 to vector<2x256xf32>
    %38 = arith.addf %37, %36 : vector<2x256xf32>
    %39 = arith.divf %37, %38 : vector<2x256xf32>
    %40 = math.tanh %34 : vector<2x256xf32>
    %41 = vector.extract_strided_slice %39 {offsets = [0, 0], sizes = [2, 64], strides = [1, 1]} : vector<2x256xf32> to vector<2x64xf32>
    %42 = vector.extract_strided_slice %39 {offsets = [0, 64], sizes = [2, 64], strides = [1, 1]} : vector<2x256xf32> to vector<2x64xf32>
    %43 = vector.extract_strided_slice %40 {offsets = [0, 128], sizes = [2, 64], strides = [1, 1]} : vector<2x256xf32> to vector<2x64xf32>
    %44 = vector.extract_strided_slice %39 {offsets = [0, 192], sizes = [2, 64], strides = [1, 1]} : vector<2x256xf32> to vector<2x64xf32>
    %45 = arith.mulf %42, %28 : vector<2x64xf32>
    %46 = arith.mulf %41, %43 : vector<2x64xf32>
    %47 = arith.addf %45, %46 : vector<2x64xf32>
    %48 = math.tanh %47 : vector<2x64xf32>
    %49 = arith.mulf %44, %48 : vector<2x64xf32>
    %50 = vector.extract_strided_slice %13 {offsets = [4, 0], sizes = [2, 256], strides = [1, 1]} : vector<16x256xf32> to vector<2x256xf32>
    %51 = arith.truncf %49 : vector<2x64xf32> to vector<2x64xbf16>
    %cst_18 = arith.constant dense<0.000000e+00> : vector<2x256xf32>
    %52 = tpu.matmul %51, %1, %cst_18 {dimension_numbers = #tpu.dot_dimension_numbers<[1], [0], [0], [1], [0, 0, 1, 1], [], []>} : vector<2x64xbf16>, vector<64x256xbf16>, vector<2x256xf32> -> vector<2x256xf32>
    %53 = arith.addf %50, %52 : vector<2x256xf32>
    %54 = arith.negf %53 : vector<2x256xf32>
    %55 = math.exp %54 : vector<2x256xf32>
    %cst_19 = arith.constant 1.000000e+00 : f32
    %56 = vector.broadcast %cst_19 : f32 to vector<2x256xf32>
    %57 = arith.addf %56, %55 : vector<2x256xf32>
    %58 = arith.divf %56, %57 : vector<2x256xf32>
    %59 = math.tanh %53 : vector<2x256xf32>
    %60 = vector.extract_strided_slice %58 {offsets = [0, 0], sizes = [2, 64], strides = [1, 1]} : vector<2x256xf32> to vector<2x64xf32>
    %61 = vector.extract_strided_slice %58 {offsets = [0, 64], sizes = [2, 64], strides = [1, 1]} : vector<2x256xf32> to vector<2x64xf32>
    %62 = vector.extract_strided_slice %59 {offsets = [0, 128], sizes = [2, 64], strides = [1, 1]} : vector<2x256xf32> to vector<2x64xf32>
    %63 = vector.extract_strided_slice %58 {offsets = [0, 192], sizes = [2, 64], strides = [1, 1]} : vector<2x256xf32> to vector<2x64xf32>
    %64 = arith.mulf %61, %47 : vector<2x64xf32>
    %65 = arith.mulf %60, %62 : vector<2x64xf32>
    %66 = arith.addf %64, %65 : vector<2x64xf32>
    %67 = math.tanh %66 : vector<2x64xf32>
    %68 = arith.mulf %63, %67 : vector<2x64xf32>
    %69 = vector.extract_strided_slice %13 {offsets = [6, 0], sizes = [2, 256], strides = [1, 1]} : vector<16x256xf32> to vector<2x256xf32>
    %70 = arith.truncf %68 : vector<2x64xf32> to vector<2x64xbf16>
    %cst_20 = arith.constant dense<0.000000e+00> : vector<2x256xf32>
    %71 = tpu.matmul %70, %1, %cst_20 {dimension_numbers = #tpu.dot_dimension_numbers<[1], [0], [0], [1], [0, 0, 1, 1], [], []>} : vector<2x64xbf16>, vector<64x256xbf16>, vector<2x256xf32> -> vector<2x256xf32>
    %72 = arith.addf %69, %71 : vector<2x256xf32>
    %73 = arith.negf %72 : vector<2x256xf32>
    %74 = math.exp %73 : vector<2x256xf32>
    %cst_21 = arith.constant 1.000000e+00 : f32
    %75 = vector.broadcast %cst_21 : f32 to vector<2x256xf32>
    %76 = arith.addf %75, %74 : vector<2x256xf32>
    %77 = arith.divf %75, %76 : vector<2x256xf32>
    %78 = math.tanh %72 : vector<2x256xf32>
    %79 = vector.extract_strided_slice %77 {offsets = [0, 0], sizes = [2, 64], strides = [1, 1]} : vector<2x256xf32> to vector<2x64xf32>
    %80 = vector.extract_strided_slice %77 {offsets = [0, 64], sizes = [2, 64], strides = [1, 1]} : vector<2x256xf32> to vector<2x64xf32>
    %81 = vector.extract_strided_slice %78 {offsets = [0, 128], sizes = [2, 64], strides = [1, 1]} : vector<2x256xf32> to vector<2x64xf32>
    %82 = vector.extract_strided_slice %77 {offsets = [0, 192], sizes = [2, 64], strides = [1, 1]} : vector<2x256xf32> to vector<2x64xf32>
    %83 = arith.mulf %80, %66 : vector<2x64xf32>
    %84 = arith.mulf %79, %81 : vector<2x64xf32>
    %85 = arith.addf %83, %84 : vector<2x64xf32>
    %86 = math.tanh %85 : vector<2x64xf32>
    %87 = arith.mulf %82, %86 : vector<2x64xf32>
    %88 = vector.extract_strided_slice %13 {offsets = [8, 0], sizes = [2, 256], strides = [1, 1]} : vector<16x256xf32> to vector<2x256xf32>
    %89 = arith.truncf %87 : vector<2x64xf32> to vector<2x64xbf16>
    %cst_22 = arith.constant dense<0.000000e+00> : vector<2x256xf32>
    %90 = tpu.matmul %89, %1, %cst_22 {dimension_numbers = #tpu.dot_dimension_numbers<[1], [0], [0], [1], [0, 0, 1, 1], [], []>} : vector<2x64xbf16>, vector<64x256xbf16>, vector<2x256xf32> -> vector<2x256xf32>
    %91 = arith.addf %88, %90 : vector<2x256xf32>
    %92 = arith.negf %91 : vector<2x256xf32>
    %93 = math.exp %92 : vector<2x256xf32>
    %cst_23 = arith.constant 1.000000e+00 : f32
    %94 = vector.broadcast %cst_23 : f32 to vector<2x256xf32>
    %95 = arith.addf %94, %93 : vector<2x256xf32>
    %96 = arith.divf %94, %95 : vector<2x256xf32>
    %97 = math.tanh %91 : vector<2x256xf32>
    %98 = vector.extract_strided_slice %96 {offsets = [0, 0], sizes = [2, 64], strides = [1, 1]} : vector<2x256xf32> to vector<2x64xf32>
    %99 = vector.extract_strided_slice %96 {offsets = [0, 64], sizes = [2, 64], strides = [1, 1]} : vector<2x256xf32> to vector<2x64xf32>
    %100 = vector.extract_strided_slice %97 {offsets = [0, 128], sizes = [2, 64], strides = [1, 1]} : vector<2x256xf32> to vector<2x64xf32>
    %101 = vector.extract_strided_slice %96 {offsets = [0, 192], sizes = [2, 64], strides = [1, 1]} : vector<2x256xf32> to vector<2x64xf32>
    %102 = arith.mulf %99, %85 : vector<2x64xf32>
    %103 = arith.mulf %98, %100 : vector<2x64xf32>
    %104 = arith.addf %102, %103 : vector<2x64xf32>
    %105 = math.tanh %104 : vector<2x64xf32>
    %106 = arith.mulf %101, %105 : vector<2x64xf32>
    %107 = vector.extract_strided_slice %13 {offsets = [10, 0], sizes = [2, 256], strides = [1, 1]} : vector<16x256xf32> to vector<2x256xf32>
    %108 = arith.truncf %106 : vector<2x64xf32> to vector<2x64xbf16>
    %cst_24 = arith.constant dense<0.000000e+00> : vector<2x256xf32>
    %109 = tpu.matmul %108, %1, %cst_24 {dimension_numbers = #tpu.dot_dimension_numbers<[1], [0], [0], [1], [0, 0, 1, 1], [], []>} : vector<2x64xbf16>, vector<64x256xbf16>, vector<2x256xf32> -> vector<2x256xf32>
    %110 = arith.addf %107, %109 : vector<2x256xf32>
    %111 = arith.negf %110 : vector<2x256xf32>
    %112 = math.exp %111 : vector<2x256xf32>
    %cst_25 = arith.constant 1.000000e+00 : f32
    %113 = vector.broadcast %cst_25 : f32 to vector<2x256xf32>
    %114 = arith.addf %113, %112 : vector<2x256xf32>
    %115 = arith.divf %113, %114 : vector<2x256xf32>
    %116 = math.tanh %110 : vector<2x256xf32>
    %117 = vector.extract_strided_slice %115 {offsets = [0, 0], sizes = [2, 64], strides = [1, 1]} : vector<2x256xf32> to vector<2x64xf32>
    %118 = vector.extract_strided_slice %115 {offsets = [0, 64], sizes = [2, 64], strides = [1, 1]} : vector<2x256xf32> to vector<2x64xf32>
    %119 = vector.extract_strided_slice %116 {offsets = [0, 128], sizes = [2, 64], strides = [1, 1]} : vector<2x256xf32> to vector<2x64xf32>
    %120 = vector.extract_strided_slice %115 {offsets = [0, 192], sizes = [2, 64], strides = [1, 1]} : vector<2x256xf32> to vector<2x64xf32>
    %121 = arith.mulf %118, %104 : vector<2x64xf32>
    %122 = arith.mulf %117, %119 : vector<2x64xf32>
    %123 = arith.addf %121, %122 : vector<2x64xf32>
    %124 = math.tanh %123 : vector<2x64xf32>
    %125 = arith.mulf %120, %124 : vector<2x64xf32>
    %126 = vector.extract_strided_slice %13 {offsets = [12, 0], sizes = [2, 256], strides = [1, 1]} : vector<16x256xf32> to vector<2x256xf32>
    %127 = arith.truncf %125 : vector<2x64xf32> to vector<2x64xbf16>
    %cst_26 = arith.constant dense<0.000000e+00> : vector<2x256xf32>
    %128 = tpu.matmul %127, %1, %cst_26 {dimension_numbers = #tpu.dot_dimension_numbers<[1], [0], [0], [1], [0, 0, 1, 1], [], []>} : vector<2x64xbf16>, vector<64x256xbf16>, vector<2x256xf32> -> vector<2x256xf32>
    %129 = arith.addf %126, %128 : vector<2x256xf32>
    %130 = arith.negf %129 : vector<2x256xf32>
    %131 = math.exp %130 : vector<2x256xf32>
    %cst_27 = arith.constant 1.000000e+00 : f32
    %132 = vector.broadcast %cst_27 : f32 to vector<2x256xf32>
    %133 = arith.addf %132, %131 : vector<2x256xf32>
    %134 = arith.divf %132, %133 : vector<2x256xf32>
    %135 = math.tanh %129 : vector<2x256xf32>
    %136 = vector.extract_strided_slice %134 {offsets = [0, 0], sizes = [2, 64], strides = [1, 1]} : vector<2x256xf32> to vector<2x64xf32>
    %137 = vector.extract_strided_slice %134 {offsets = [0, 64], sizes = [2, 64], strides = [1, 1]} : vector<2x256xf32> to vector<2x64xf32>
    %138 = vector.extract_strided_slice %135 {offsets = [0, 128], sizes = [2, 64], strides = [1, 1]} : vector<2x256xf32> to vector<2x64xf32>
    %139 = vector.extract_strided_slice %134 {offsets = [0, 192], sizes = [2, 64], strides = [1, 1]} : vector<2x256xf32> to vector<2x64xf32>
    %140 = arith.mulf %137, %123 : vector<2x64xf32>
    %141 = arith.mulf %136, %138 : vector<2x64xf32>
    %142 = arith.addf %140, %141 : vector<2x64xf32>
    %143 = math.tanh %142 : vector<2x64xf32>
    %144 = arith.mulf %139, %143 : vector<2x64xf32>
    %145 = vector.extract_strided_slice %13 {offsets = [14, 0], sizes = [2, 256], strides = [1, 1]} : vector<16x256xf32> to vector<2x256xf32>
    %146 = arith.truncf %144 : vector<2x64xf32> to vector<2x64xbf16>
    %cst_28 = arith.constant dense<0.000000e+00> : vector<2x256xf32>
    %147 = tpu.matmul %146, %1, %cst_28 {dimension_numbers = #tpu.dot_dimension_numbers<[1], [0], [0], [1], [0, 0, 1, 1], [], []>} : vector<2x64xbf16>, vector<64x256xbf16>, vector<2x256xf32> -> vector<2x256xf32>
    %148 = arith.addf %145, %147 : vector<2x256xf32>
    %149 = arith.negf %148 : vector<2x256xf32>
    %150 = math.exp %149 : vector<2x256xf32>
    %cst_29 = arith.constant 1.000000e+00 : f32
    %151 = vector.broadcast %cst_29 : f32 to vector<2x256xf32>
    %152 = arith.addf %151, %150 : vector<2x256xf32>
    %153 = arith.divf %151, %152 : vector<2x256xf32>
    %154 = math.tanh %148 : vector<2x256xf32>
    %155 = vector.extract_strided_slice %153 {offsets = [0, 0], sizes = [2, 64], strides = [1, 1]} : vector<2x256xf32> to vector<2x64xf32>
    %156 = vector.extract_strided_slice %153 {offsets = [0, 64], sizes = [2, 64], strides = [1, 1]} : vector<2x256xf32> to vector<2x64xf32>
    %157 = vector.extract_strided_slice %154 {offsets = [0, 128], sizes = [2, 64], strides = [1, 1]} : vector<2x256xf32> to vector<2x64xf32>
    %158 = vector.extract_strided_slice %153 {offsets = [0, 192], sizes = [2, 64], strides = [1, 1]} : vector<2x256xf32> to vector<2x64xf32>
    %159 = arith.mulf %156, %142 : vector<2x64xf32>
    %160 = arith.mulf %155, %157 : vector<2x64xf32>
    %161 = arith.addf %159, %160 : vector<2x64xf32>
    %162 = math.tanh %161 : vector<2x64xf32>
    %163 = arith.mulf %158, %162 : vector<2x64xf32>
    %164 = vector.extract_strided_slice %30 {offsets = [0, 0], sizes = [2, 32], strides = [1, 1]} : vector<2x64xf32> to vector<2x32xf32>
    %165 = vector.extract_strided_slice %163 {offsets = [0, 32], sizes = [2, 32], strides = [1, 1]} : vector<2x64xf32> to vector<2x32xf32>
    %166 = tpu.concatenate %164, %165 in 1 : vector<2x32xf32>, vector<2x32xf32> -> vector<2x64xf32>
    %167 = vector.extract_strided_slice %49 {offsets = [0, 0], sizes = [2, 32], strides = [1, 1]} : vector<2x64xf32> to vector<2x32xf32>
    %168 = vector.extract_strided_slice %144 {offsets = [0, 32], sizes = [2, 32], strides = [1, 1]} : vector<2x64xf32> to vector<2x32xf32>
    %169 = tpu.concatenate %167, %168 in 1 : vector<2x32xf32>, vector<2x32xf32> -> vector<2x64xf32>
    %170 = vector.extract_strided_slice %68 {offsets = [0, 0], sizes = [2, 32], strides = [1, 1]} : vector<2x64xf32> to vector<2x32xf32>
    %171 = vector.extract_strided_slice %125 {offsets = [0, 32], sizes = [2, 32], strides = [1, 1]} : vector<2x64xf32> to vector<2x32xf32>
    %172 = tpu.concatenate %170, %171 in 1 : vector<2x32xf32>, vector<2x32xf32> -> vector<2x64xf32>
    %173 = vector.extract_strided_slice %87 {offsets = [0, 0], sizes = [2, 32], strides = [1, 1]} : vector<2x64xf32> to vector<2x32xf32>
    %174 = vector.extract_strided_slice %106 {offsets = [0, 32], sizes = [2, 32], strides = [1, 1]} : vector<2x64xf32> to vector<2x32xf32>
    %175 = tpu.concatenate %173, %174 in 1 : vector<2x32xf32>, vector<2x32xf32> -> vector<2x64xf32>
    %176 = vector.extract_strided_slice %106 {offsets = [0, 0], sizes = [2, 32], strides = [1, 1]} : vector<2x64xf32> to vector<2x32xf32>
    %177 = vector.extract_strided_slice %87 {offsets = [0, 32], sizes = [2, 32], strides = [1, 1]} : vector<2x64xf32> to vector<2x32xf32>
    %178 = tpu.concatenate %176, %177 in 1 : vector<2x32xf32>, vector<2x32xf32> -> vector<2x64xf32>
    %179 = vector.extract_strided_slice %125 {offsets = [0, 0], sizes = [2, 32], strides = [1, 1]} : vector<2x64xf32> to vector<2x32xf32>
    %180 = vector.extract_strided_slice %68 {offsets = [0, 32], sizes = [2, 32], strides = [1, 1]} : vector<2x64xf32> to vector<2x32xf32>
    %181 = tpu.concatenate %179, %180 in 1 : vector<2x32xf32>, vector<2x32xf32> -> vector<2x64xf32>
    %182 = vector.extract_strided_slice %144 {offsets = [0, 0], sizes = [2, 32], strides = [1, 1]} : vector<2x64xf32> to vector<2x32xf32>
    %183 = vector.extract_strided_slice %49 {offsets = [0, 32], sizes = [2, 32], strides = [1, 1]} : vector<2x64xf32> to vector<2x32xf32>
    %184 = tpu.concatenate %182, %183 in 1 : vector<2x32xf32>, vector<2x32xf32> -> vector<2x64xf32>
    %185 = vector.extract_strided_slice %163 {offsets = [0, 0], sizes = [2, 32], strides = [1, 1]} : vector<2x64xf32> to vector<2x32xf32>
    %186 = vector.extract_strided_slice %30 {offsets = [0, 32], sizes = [2, 32], strides = [1, 1]} : vector<2x64xf32> to vector<2x32xf32>
    %187 = tpu.concatenate %185, %186 in 1 : vector<2x32xf32>, vector<2x32xf32> -> vector<2x64xf32>
    %188 = tpu.concatenate %166, %169, %172, %175, %178, %181, %184, %187 in 0 : vector<2x64xf32>, vector<2x64xf32>, vector<2x64xf32>, vector<2x64xf32>, vector<2x64xf32>, vector<2x64xf32>, vector<2x64xf32>, vector<2x64xf32> -> vector<16x64xf32>
    %189 = arith.truncf %188 : vector<16x64xf32> to vector<16x64xbf16>
    %cst_30 = arith.constant dense<0.000000e+00> : vector<16x128xf32>
    %190 = tpu.matmul %189, %2, %cst_30 {dimension_numbers = #tpu.dot_dimension_numbers<[1], [0], [0], [1], [0, 0, 1, 1], [], []>} : vector<16x64xbf16>, vector<64x128xbf16>, vector<16x128xf32> -> vector<16x128xf32>
    %191 = vector.broadcast %7 : vector<1x128xf32> to vector<16x128xf32>
    %192 = arith.addf %190, %191 : vector<16x128xf32>
    %cst_31 = arith.constant 0.000000e+00 : f32
    %193 = vector.broadcast %cst_31 : f32 to vector<2x32xf32>
    %194 = vector.extract_strided_slice %192 {offsets = [0, 0], sizes = [2, 128], strides = [1, 1]} : vector<16x128xf32> to vector<2x128xf32>
    %195 = arith.negf %194 : vector<2x128xf32>
    %196 = math.exp %195 : vector<2x128xf32>
    %cst_32 = arith.constant 1.000000e+00 : f32
    %197 = vector.broadcast %cst_32 : f32 to vector<2x128xf32>
    %198 = arith.addf %197, %196 : vector<2x128xf32>
    %199 = arith.divf %197, %198 : vector<2x128xf32>
    %200 = math.tanh %194 : vector<2x128xf32>
    %201 = vector.extract_strided_slice %199 {offsets = [0, 0], sizes = [2, 32], strides = [1, 1]} : vector<2x128xf32> to vector<2x32xf32>
    %202 = vector.extract_strided_slice %199 {offsets = [0, 32], sizes = [2, 32], strides = [1, 1]} : vector<2x128xf32> to vector<2x32xf32>
    %203 = vector.extract_strided_slice %200 {offsets = [0, 64], sizes = [2, 32], strides = [1, 1]} : vector<2x128xf32> to vector<2x32xf32>
    %204 = vector.extract_strided_slice %199 {offsets = [0, 96], sizes = [2, 32], strides = [1, 1]} : vector<2x128xf32> to vector<2x32xf32>
    %205 = arith.mulf %202, %193 : vector<2x32xf32>
    %206 = arith.mulf %201, %203 : vector<2x32xf32>
    %207 = arith.addf %205, %206 : vector<2x32xf32>
    %208 = math.tanh %207 : vector<2x32xf32>
    %209 = arith.mulf %204, %208 : vector<2x32xf32>
    %210 = vector.extract_strided_slice %192 {offsets = [2, 0], sizes = [2, 128], strides = [1, 1]} : vector<16x128xf32> to vector<2x128xf32>
    %211 = arith.truncf %209 : vector<2x32xf32> to vector<2x32xbf16>
    %cst_33 = arith.constant dense<0.000000e+00> : vector<2x128xf32>
    %212 = tpu.matmul %211, %3, %cst_33 {dimension_numbers = #tpu.dot_dimension_numbers<[1], [0], [0], [1], [0, 0, 1, 1], [], []>} : vector<2x32xbf16>, vector<32x128xbf16>, vector<2x128xf32> -> vector<2x128xf32>
    %213 = arith.addf %210, %212 : vector<2x128xf32>
    %214 = arith.negf %213 : vector<2x128xf32>
    %215 = math.exp %214 : vector<2x128xf32>
    %cst_34 = arith.constant 1.000000e+00 : f32
    %216 = vector.broadcast %cst_34 : f32 to vector<2x128xf32>
    %217 = arith.addf %216, %215 : vector<2x128xf32>
    %218 = arith.divf %216, %217 : vector<2x128xf32>
    %219 = math.tanh %213 : vector<2x128xf32>
    %220 = vector.extract_strided_slice %218 {offsets = [0, 0], sizes = [2, 32], strides = [1, 1]} : vector<2x128xf32> to vector<2x32xf32>
    %221 = vector.extract_strided_slice %218 {offsets = [0, 32], sizes = [2, 32], strides = [1, 1]} : vector<2x128xf32> to vector<2x32xf32>
    %222 = vector.extract_strided_slice %219 {offsets = [0, 64], sizes = [2, 32], strides = [1, 1]} : vector<2x128xf32> to vector<2x32xf32>
    %223 = vector.extract_strided_slice %218 {offsets = [0, 96], sizes = [2, 32], strides = [1, 1]} : vector<2x128xf32> to vector<2x32xf32>
    %224 = arith.mulf %221, %207 : vector<2x32xf32>
    %225 = arith.mulf %220, %222 : vector<2x32xf32>
    %226 = arith.addf %224, %225 : vector<2x32xf32>
    %227 = math.tanh %226 : vector<2x32xf32>
    %228 = arith.mulf %223, %227 : vector<2x32xf32>
    %229 = vector.extract_strided_slice %192 {offsets = [4, 0], sizes = [2, 128], strides = [1, 1]} : vector<16x128xf32> to vector<2x128xf32>
    %230 = arith.truncf %228 : vector<2x32xf32> to vector<2x32xbf16>
    %cst_35 = arith.constant dense<0.000000e+00> : vector<2x128xf32>
    %231 = tpu.matmul %230, %3, %cst_35 {dimension_numbers = #tpu.dot_dimension_numbers<[1], [0], [0], [1], [0, 0, 1, 1], [], []>} : vector<2x32xbf16>, vector<32x128xbf16>, vector<2x128xf32> -> vector<2x128xf32>
    %232 = arith.addf %229, %231 : vector<2x128xf32>
    %233 = arith.negf %232 : vector<2x128xf32>
    %234 = math.exp %233 : vector<2x128xf32>
    %cst_36 = arith.constant 1.000000e+00 : f32
    %235 = vector.broadcast %cst_36 : f32 to vector<2x128xf32>
    %236 = arith.addf %235, %234 : vector<2x128xf32>
    %237 = arith.divf %235, %236 : vector<2x128xf32>
    %238 = math.tanh %232 : vector<2x128xf32>
    %239 = vector.extract_strided_slice %237 {offsets = [0, 0], sizes = [2, 32], strides = [1, 1]} : vector<2x128xf32> to vector<2x32xf32>
    %240 = vector.extract_strided_slice %237 {offsets = [0, 32], sizes = [2, 32], strides = [1, 1]} : vector<2x128xf32> to vector<2x32xf32>
    %241 = vector.extract_strided_slice %238 {offsets = [0, 64], sizes = [2, 32], strides = [1, 1]} : vector<2x128xf32> to vector<2x32xf32>
    %242 = vector.extract_strided_slice %237 {offsets = [0, 96], sizes = [2, 32], strides = [1, 1]} : vector<2x128xf32> to vector<2x32xf32>
    %243 = arith.mulf %240, %226 : vector<2x32xf32>
    %244 = arith.mulf %239, %241 : vector<2x32xf32>
    %245 = arith.addf %243, %244 : vector<2x32xf32>
    %246 = math.tanh %245 : vector<2x32xf32>
    %247 = arith.mulf %242, %246 : vector<2x32xf32>
    %248 = vector.extract_strided_slice %192 {offsets = [6, 0], sizes = [2, 128], strides = [1, 1]} : vector<16x128xf32> to vector<2x128xf32>
    %249 = arith.truncf %247 : vector<2x32xf32> to vector<2x32xbf16>
    %cst_37 = arith.constant dense<0.000000e+00> : vector<2x128xf32>
    %250 = tpu.matmul %249, %3, %cst_37 {dimension_numbers = #tpu.dot_dimension_numbers<[1], [0], [0], [1], [0, 0, 1, 1], [], []>} : vector<2x32xbf16>, vector<32x128xbf16>, vector<2x128xf32> -> vector<2x128xf32>
    %251 = arith.addf %248, %250 : vector<2x128xf32>
    %252 = arith.negf %251 : vector<2x128xf32>
    %253 = math.exp %252 : vector<2x128xf32>
    %cst_38 = arith.constant 1.000000e+00 : f32
    %254 = vector.broadcast %cst_38 : f32 to vector<2x128xf32>
    %255 = arith.addf %254, %253 : vector<2x128xf32>
    %256 = arith.divf %254, %255 : vector<2x128xf32>
    %257 = math.tanh %251 : vector<2x128xf32>
    %258 = vector.extract_strided_slice %256 {offsets = [0, 0], sizes = [2, 32], strides = [1, 1]} : vector<2x128xf32> to vector<2x32xf32>
    %259 = vector.extract_strided_slice %256 {offsets = [0, 32], sizes = [2, 32], strides = [1, 1]} : vector<2x128xf32> to vector<2x32xf32>
    %260 = vector.extract_strided_slice %257 {offsets = [0, 64], sizes = [2, 32], strides = [1, 1]} : vector<2x128xf32> to vector<2x32xf32>
    %261 = vector.extract_strided_slice %256 {offsets = [0, 96], sizes = [2, 32], strides = [1, 1]} : vector<2x128xf32> to vector<2x32xf32>
    %262 = arith.mulf %259, %245 : vector<2x32xf32>
    %263 = arith.mulf %258, %260 : vector<2x32xf32>
    %264 = arith.addf %262, %263 : vector<2x32xf32>
    %265 = math.tanh %264 : vector<2x32xf32>
    %266 = arith.mulf %261, %265 : vector<2x32xf32>
    %267 = vector.extract_strided_slice %192 {offsets = [8, 0], sizes = [2, 128], strides = [1, 1]} : vector<16x128xf32> to vector<2x128xf32>
    %268 = arith.truncf %266 : vector<2x32xf32> to vector<2x32xbf16>
    %cst_39 = arith.constant dense<0.000000e+00> : vector<2x128xf32>
    %269 = tpu.matmul %268, %3, %cst_39 {dimension_numbers = #tpu.dot_dimension_numbers<[1], [0], [0], [1], [0, 0, 1, 1], [], []>} : vector<2x32xbf16>, vector<32x128xbf16>, vector<2x128xf32> -> vector<2x128xf32>
    %270 = arith.addf %267, %269 : vector<2x128xf32>
    %271 = arith.negf %270 : vector<2x128xf32>
    %272 = math.exp %271 : vector<2x128xf32>
    %cst_40 = arith.constant 1.000000e+00 : f32
    %273 = vector.broadcast %cst_40 : f32 to vector<2x128xf32>
    %274 = arith.addf %273, %272 : vector<2x128xf32>
    %275 = arith.divf %273, %274 : vector<2x128xf32>
    %276 = math.tanh %270 : vector<2x128xf32>
    %277 = vector.extract_strided_slice %275 {offsets = [0, 0], sizes = [2, 32], strides = [1, 1]} : vector<2x128xf32> to vector<2x32xf32>
    %278 = vector.extract_strided_slice %275 {offsets = [0, 32], sizes = [2, 32], strides = [1, 1]} : vector<2x128xf32> to vector<2x32xf32>
    %279 = vector.extract_strided_slice %276 {offsets = [0, 64], sizes = [2, 32], strides = [1, 1]} : vector<2x128xf32> to vector<2x32xf32>
    %280 = vector.extract_strided_slice %275 {offsets = [0, 96], sizes = [2, 32], strides = [1, 1]} : vector<2x128xf32> to vector<2x32xf32>
    %281 = arith.mulf %278, %264 : vector<2x32xf32>
    %282 = arith.mulf %277, %279 : vector<2x32xf32>
    %283 = arith.addf %281, %282 : vector<2x32xf32>
    %284 = math.tanh %283 : vector<2x32xf32>
    %285 = arith.mulf %280, %284 : vector<2x32xf32>
    %286 = vector.extract_strided_slice %192 {offsets = [10, 0], sizes = [2, 128], strides = [1, 1]} : vector<16x128xf32> to vector<2x128xf32>
    %287 = arith.truncf %285 : vector<2x32xf32> to vector<2x32xbf16>
    %cst_41 = arith.constant dense<0.000000e+00> : vector<2x128xf32>
    %288 = tpu.matmul %287, %3, %cst_41 {dimension_numbers = #tpu.dot_dimension_numbers<[1], [0], [0], [1], [0, 0, 1, 1], [], []>} : vector<2x32xbf16>, vector<32x128xbf16>, vector<2x128xf32> -> vector<2x128xf32>
    %289 = arith.addf %286, %288 : vector<2x128xf32>
    %290 = arith.negf %289 : vector<2x128xf32>
    %291 = math.exp %290 : vector<2x128xf32>
    %cst_42 = arith.constant 1.000000e+00 : f32
    %292 = vector.broadcast %cst_42 : f32 to vector<2x128xf32>
    %293 = arith.addf %292, %291 : vector<2x128xf32>
    %294 = arith.divf %292, %293 : vector<2x128xf32>
    %295 = math.tanh %289 : vector<2x128xf32>
    %296 = vector.extract_strided_slice %294 {offsets = [0, 0], sizes = [2, 32], strides = [1, 1]} : vector<2x128xf32> to vector<2x32xf32>
    %297 = vector.extract_strided_slice %294 {offsets = [0, 32], sizes = [2, 32], strides = [1, 1]} : vector<2x128xf32> to vector<2x32xf32>
    %298 = vector.extract_strided_slice %295 {offsets = [0, 64], sizes = [2, 32], strides = [1, 1]} : vector<2x128xf32> to vector<2x32xf32>
    %299 = vector.extract_strided_slice %294 {offsets = [0, 96], sizes = [2, 32], strides = [1, 1]} : vector<2x128xf32> to vector<2x32xf32>
    %300 = arith.mulf %297, %283 : vector<2x32xf32>
    %301 = arith.mulf %296, %298 : vector<2x32xf32>
    %302 = arith.addf %300, %301 : vector<2x32xf32>
    %303 = math.tanh %302 : vector<2x32xf32>
    %304 = arith.mulf %299, %303 : vector<2x32xf32>
    %305 = vector.extract_strided_slice %192 {offsets = [12, 0], sizes = [2, 128], strides = [1, 1]} : vector<16x128xf32> to vector<2x128xf32>
    %306 = arith.truncf %304 : vector<2x32xf32> to vector<2x32xbf16>
    %cst_43 = arith.constant dense<0.000000e+00> : vector<2x128xf32>
    %307 = tpu.matmul %306, %3, %cst_43 {dimension_numbers = #tpu.dot_dimension_numbers<[1], [0], [0], [1], [0, 0, 1, 1], [], []>} : vector<2x32xbf16>, vector<32x128xbf16>, vector<2x128xf32> -> vector<2x128xf32>
    %308 = arith.addf %305, %307 : vector<2x128xf32>
    %309 = arith.negf %308 : vector<2x128xf32>
    %310 = math.exp %309 : vector<2x128xf32>
    %cst_44 = arith.constant 1.000000e+00 : f32
    %311 = vector.broadcast %cst_44 : f32 to vector<2x128xf32>
    %312 = arith.addf %311, %310 : vector<2x128xf32>
    %313 = arith.divf %311, %312 : vector<2x128xf32>
    %314 = math.tanh %308 : vector<2x128xf32>
    %315 = vector.extract_strided_slice %313 {offsets = [0, 0], sizes = [2, 32], strides = [1, 1]} : vector<2x128xf32> to vector<2x32xf32>
    %316 = vector.extract_strided_slice %313 {offsets = [0, 32], sizes = [2, 32], strides = [1, 1]} : vector<2x128xf32> to vector<2x32xf32>
    %317 = vector.extract_strided_slice %314 {offsets = [0, 64], sizes = [2, 32], strides = [1, 1]} : vector<2x128xf32> to vector<2x32xf32>
    %318 = vector.extract_strided_slice %313 {offsets = [0, 96], sizes = [2, 32], strides = [1, 1]} : vector<2x128xf32> to vector<2x32xf32>
    %319 = arith.mulf %316, %302 : vector<2x32xf32>
    %320 = arith.mulf %315, %317 : vector<2x32xf32>
    %321 = arith.addf %319, %320 : vector<2x32xf32>
    %322 = math.tanh %321 : vector<2x32xf32>
    %323 = arith.mulf %318, %322 : vector<2x32xf32>
    %324 = vector.extract_strided_slice %192 {offsets = [14, 0], sizes = [2, 128], strides = [1, 1]} : vector<16x128xf32> to vector<2x128xf32>
    %325 = arith.truncf %323 : vector<2x32xf32> to vector<2x32xbf16>
    %cst_45 = arith.constant dense<0.000000e+00> : vector<2x128xf32>
    %326 = tpu.matmul %325, %3, %cst_45 {dimension_numbers = #tpu.dot_dimension_numbers<[1], [0], [0], [1], [0, 0, 1, 1], [], []>} : vector<2x32xbf16>, vector<32x128xbf16>, vector<2x128xf32> -> vector<2x128xf32>
    %327 = arith.addf %324, %326 : vector<2x128xf32>
    %328 = arith.negf %327 : vector<2x128xf32>
    %329 = math.exp %328 : vector<2x128xf32>
    %cst_46 = arith.constant 1.000000e+00 : f32
    %330 = vector.broadcast %cst_46 : f32 to vector<2x128xf32>
    %331 = arith.addf %330, %329 : vector<2x128xf32>
    %332 = arith.divf %330, %331 : vector<2x128xf32>
    %333 = math.tanh %327 : vector<2x128xf32>
    %334 = vector.extract_strided_slice %332 {offsets = [0, 0], sizes = [2, 32], strides = [1, 1]} : vector<2x128xf32> to vector<2x32xf32>
    %335 = vector.extract_strided_slice %332 {offsets = [0, 32], sizes = [2, 32], strides = [1, 1]} : vector<2x128xf32> to vector<2x32xf32>
    %336 = vector.extract_strided_slice %333 {offsets = [0, 64], sizes = [2, 32], strides = [1, 1]} : vector<2x128xf32> to vector<2x32xf32>
    %337 = vector.extract_strided_slice %332 {offsets = [0, 96], sizes = [2, 32], strides = [1, 1]} : vector<2x128xf32> to vector<2x32xf32>
    %338 = arith.mulf %335, %321 : vector<2x32xf32>
    %339 = arith.mulf %334, %336 : vector<2x32xf32>
    %340 = arith.addf %338, %339 : vector<2x32xf32>
    %341 = math.tanh %340 : vector<2x32xf32>
    %342 = arith.mulf %337, %341 : vector<2x32xf32>
    %343 = vector.extract_strided_slice %189 {offsets = [14, 0], sizes = [2, 64], strides = [1, 1]} : vector<16x64xbf16> to vector<2x64xbf16>
    %cst_47 = arith.constant dense<0.000000e+00> : vector<2x128xf32>
    %344 = tpu.matmul %343, %4, %cst_47 {dimension_numbers = #tpu.dot_dimension_numbers<[1], [0], [0], [1], [0, 0, 1, 1], [], []>} : vector<2x64xbf16>, vector<64x128xbf16>, vector<2x128xf32> -> vector<2x128xf32>
    %345 = vector.broadcast %8 : vector<1x128xf32> to vector<2x128xf32>
    %346 = arith.addf %344, %345 : vector<2x128xf32>
    %cst_48 = arith.constant 0.000000e+00 : f32
    %347 = vector.broadcast %cst_48 : f32 to vector<2x32xf32>
    %348 = arith.negf %346 : vector<2x128xf32>
    %349 = math.exp %348 : vector<2x128xf32>
    %cst_49 = arith.constant 1.000000e+00 : f32
    %350 = vector.broadcast %cst_49 : f32 to vector<2x128xf32>
    %351 = arith.addf %350, %349 : vector<2x128xf32>
    %352 = arith.divf %350, %351 : vector<2x128xf32>
    %353 = math.tanh %346 : vector<2x128xf32>
    %354 = vector.extract_strided_slice %352 {offsets = [0, 0], sizes = [2, 32], strides = [1, 1]} : vector<2x128xf32> to vector<2x32xf32>
    %355 = vector.extract_strided_slice %352 {offsets = [0, 32], sizes = [2, 32], strides = [1, 1]} : vector<2x128xf32> to vector<2x32xf32>
    %356 = vector.extract_strided_slice %353 {offsets = [0, 64], sizes = [2, 32], strides = [1, 1]} : vector<2x128xf32> to vector<2x32xf32>
    %357 = vector.extract_strided_slice %352 {offsets = [0, 96], sizes = [2, 32], strides = [1, 1]} : vector<2x128xf32> to vector<2x32xf32>
    %358 = arith.mulf %355, %347 : vector<2x32xf32>
    %359 = arith.mulf %354, %356 : vector<2x32xf32>
    %360 = arith.addf %358, %359 : vector<2x32xf32>
    %361 = math.tanh %360 : vector<2x32xf32>
    %362 = arith.mulf %357, %361 : vector<2x32xf32>
    %363 = tpu.concatenate %342, %362 in 1 : vector<2x32xf32>, vector<2x32xf32> -> vector<2x64xf32>
    %364 = arith.truncf %363 : vector<2x64xf32> to vector<2x64xbf16>
    %cst_50 = arith.constant dense<0.000000e+00> : vector<2x128xf32>
    %365 = tpu.matmul %364, %5, %cst_50 {dimension_numbers = #tpu.dot_dimension_numbers<[1], [0], [0], [1], [0, 0, 1, 1], [], []>} : vector<2x64xbf16>, vector<64x128xbf16>, vector<2x128xf32> -> vector<2x128xf32>
    %366 = vector.broadcast %9 : vector<1x128xf32> to vector<2x128xf32>
    %367 = arith.addf %365, %366 : vector<2x128xf32>
    %368 = vector.extract_strided_slice %367 {offsets = [0, 0], sizes = [2, 10], strides = [1, 1]} : vector<2x128xf32> to vector<2x10xf32>
    %c0_51 = arith.constant 0 : index
    %c0_52 = arith.constant 0 : index
    %369 = vector.load %arg4[%c0_51, %c0_52] : memref<2x10xf32, #tpu.memory_space<vmem>>, vector<2x10xf32>
    tpu.vector_store %arg4[%c0_51, %c0_52], %368 {strides = array<i32>} : memref<2x10xf32, #tpu.memory_space<vmem>>, vector<2x10xf32>,
    return
  }
}

</mosaic_0001>

<llo_original>
// kernel: tpu_custom_call.1
$region0: #{tpu_custom_call.1}
  #allocation0 [shape = 'u32[]', space=smem, size = 0x4, offset = 0x4, fixed_abs, tag = 'smem constant byte address 0x4 - core index']
  #allocation1 [shape = 'u32[144,128]{1,0:T(1,128)}', space=vmem, size = 0x12000, scoped, tag = 'internal scratch']
  %s0 = inlined_call_operand.vmem [shape: bf16[16,8], index: 0, kind: input, shape index: {}]
  %s1 = inlined_call_operand.hbm [shape: bf16[72,256], index: 1, kind: input, shape index: {}]
  %s2 = inlined_call_operand.hbm [shape: bf16[224,128], index: 2, kind: input, shape index: {}]
  %s3 = inlined_call_operand.vmem [shape: f32[8,256], index: 3, kind: input, shape index: {}]
  %s4 = inlined_call_operand.hbm [shape: f32[2,10], index: 4, kind: output, shape index: {}]
  %s5 = sld [smem:[#allocation0]]
  $region34: #{tpu_custom_call.1} parent=0
    _
  %s7 = ssub.s32 1, %s5
  %s8 = scalar_select 0, %s7, %s5
  $region1: #{tpu_custom_call.1} parent=0
    #allocation2 [shape = 'u8[36864]{0}', space=vmem, size = 0x9000, scoped, tag = 'input window, operand 1, single buffered']
    #allocation3 [shape = 's32[1]{0}', space=sflag, size = 0x4, scoped, tag = 'scoped memory for tpu_custom_call.1']
    #allocation4 [shape = 's32[1]{0}', space=sflag, size = 0x4, scoped, tag = 'scoped memory for tpu_custom_call.1']
    #allocation5 [shape = 'u8[57344]{0}', space=vmem, size = 0xe000, scoped, tag = 'input window, operand 2, single buffered']
    #allocation6 [shape = 's32[1]{0}', space=sflag, size = 0x4, scoped, tag = 'scoped memory for tpu_custom_call.1']
    #allocation7 [shape = 'u8[1024]{0}', space=vmem, size = 0x400, scoped, tag = 'output window, operand 0, single buffered']
    %9 = vsyncpa [#allocation3], 0
    %10 = vsyncpa [#allocation6], 0
    %11 = vsyncpa [#allocation4], 0
    // Predicated region
    $region2: #{tpu_custom_call.1} parent=1 // pred_check
      _
    $region3: #{tpu_custom_call.1} parent=1 // pred_check_branch
      %13 = sbr.rel (0) target = $region5
    $region4: #{tpu_custom_call.1} parent=1 // pred_region
      _
    $region5: #{tpu_custom_call.1} parent=1 // pred_fallthru
      _
    // Predicated region
    $region6: #{tpu_custom_call.1} parent=1 // pred_check
      _
    $region7: #{tpu_custom_call.1} parent=1 // pred_check_branch
      %15 = sbr.rel (0) target = $region9
    $region8: #{tpu_custom_call.1} parent=1 // pred_region
      %s17 = ssub.s32 1152, 1152
      %18 = vsyncadd [#allocation3], %s17
      %s19 = sshll.u32 [#allocation2], 4
      %s20 = int_to_ptr.vmem [resolvable:$true] %s19
      %25 = dma.hbm_to_vmem [thread:$0]  %s1, 1152, %s20, [#allocation3], 128, 128, 8
    $region9: #{tpu_custom_call.1} parent=1 // pred_fallthru
      _
    // Predicated region
    $region10: #{tpu_custom_call.1} parent=1 // pred_check
      _
    $region11: #{tpu_custom_call.1} parent=1 // pred_check_branch
      %27 = sbr.rel (0) target = $region13
    $region12: #{tpu_custom_call.1} parent=1 // pred_region
      %s29 = ssub.s32 1792, 1792
      %30 = vsyncadd [#allocation6], %s29
      %s31 = sshll.u32 [#allocation5], 4
      %s32 = int_to_ptr.vmem [resolvable:$true] %s31
      %37 = dma.hbm_to_vmem [thread:$0]  %s2, 1792, %s32, [#allocation6], 64, 64, 4
    $region13: #{tpu_custom_call.1} parent=1 // pred_fallthru
      _
    // Predicated region
    $region14: #{tpu_custom_call.1} parent=1 // pred_check
      _
    $region15: #{tpu_custom_call.1} parent=1 // pred_check_branch
      %39 = sbr.rel (0) target = $region17
    $region16: #{tpu_custom_call.1} parent=1 // pred_region
      _
    $region17: #{tpu_custom_call.1} parent=1 // pred_fallthru
      _
    // Predicated region
    $region18: #{tpu_custom_call.1} parent=1 // pred_check
      _
    $region19: #{tpu_custom_call.1} parent=1 // pred_check_branch
      %41 = sbr.rel (0) target = $region21
    $region20: #{tpu_custom_call.1} parent=1 // pred_region
      %42 = dma.done [#allocation3], 1152
    $region21: #{tpu_custom_call.1} parent=1 // pred_fallthru
      _
    // Predicated region
    $region22: #{tpu_custom_call.1} parent=1 // pred_check
      _
    $region23: #{tpu_custom_call.1} parent=1 // pred_check_branch
      %44 = sbr.rel (0) target = $region25
    $region24: #{tpu_custom_call.1} parent=1 // pred_region
      %45 = dma.done [#allocation6], 1792
    $region25: #{tpu_custom_call.1} parent=1 // pred_fallthru
      _
    %v47 = vld [vmem:[#allocation2] sm:$0xff]
    %v48 = vld [vmem:[#allocation2 + $0x8] sm:$0xff]
    %v49 = vld [vmem:[#allocation2 + $0x10] sm:$0xff]
    %v50 = vld [vmem:[#allocation2 + $0x18] sm:$0xff]
    %v51 = vld [vmem:[#allocation2 + $0x20] sm:$0xff]
    %v52 = vld [vmem:[#allocation2 + $0x28] sm:$0xff]
    %v53 = vld [vmem:[#allocation2 + $0x30] sm:$0xff]
    %v54 = vld [vmem:[#allocation2 + $0x38] sm:$0xff]
    %v55 = vld [vmem:[#allocation2 + $0x40] sm:$0xff]
    %v56 = vld [vmem:[#allocation5] sm:$0xf]
    %v57 = vld [vmem:[#allocation5 + $0x4] sm:$0xf]
    %v58 = vld [vmem:[#allocation5 + $0x8] sm:$0xf]
    %v59 = vld [vmem:[#allocation5 + $0xc] sm:$0xf]
    %v60 = vld [vmem:[#allocation5 + $0x10] sm:$0xf]
    %v61 = vld [vmem:[#allocation5 + $0x14] sm:$0xf]
    %v62 = vld [vmem:[#allocation5 + $0x18] sm:$0xf]
    %v63 = vld [vmem:[#allocation5 + $0x1c] sm:$0xf]
    %v64 = vld [vmem:[#allocation5 + $0x20] sm:$0xf]
    %v65 = vld [vmem:[#allocation5 + $0x24] sm:$0xf]
    %v66 = vld [vmem:[#allocation5 + $0x28] sm:$0xf]
    %v67 = vld [vmem:[#allocation5 + $0x2c] sm:$0xf]
    %v68 = vld [vmem:[#allocation5 + $0x30] sm:$0xf]
    %v69 = vld [vmem:[#allocation5 + $0x34] sm:$0xf]
    %v70 = vld [vmem:[#allocation5 + $0x38] sm:$0xf]
    %v71 = vld [vmem:[#allocation5 + $0x3c] sm:$0xf]
    %v72 = vld [vmem:[#allocation5 + $0x40] sm:$0xf]
    %v73 = vld [vmem:[#allocation5 + $0x44] sm:$0xf]
    %v74 = vld [vmem:[#allocation5 + $0x48] sm:$0xf]
    %v75 = vld [vmem:[#allocation5 + $0x4c] sm:$0xf]
    %v76 = vld [vmem:[#allocation5 + $0x50] sm:$0xf]
    %v77 = vld [vmem:[#allocation5 + $0x54] sm:$0xf]
    %v78 = vld [vmem:[#allocation5 + $0x58] sm:$0xf]
    %v79 = vld [vmem:[#allocation5 + $0x5c] sm:$0xf]
    %v80 = vld [vmem:[#allocation5 + $0x60] sm:$0xf]
    %v81 = vld [vmem:[#allocation5 + $0x64] sm:$0xf]
    %v82 = vld [vmem:[#allocation5 + $0x68] sm:$0xf]
    %v83 = vld [vmem:[#allocation5 + $0x6c] sm:$0xf]
    %v84 = vld [vmem:[%s3] ss:$8 sm:$0x3]
    %v85 = vld [vmem:[%s3 + $0x1] ss:$0 sm:$0xff]
    %v86 = vld [vmem:[%s3 + $0x2] ss:$0 sm:$0xff]
    %v87 = vld [vmem:[%s3 + $0x3] ss:$0 sm:$0xff]
    %v88 = vld [vmem:[%s0] sm:$0xf]
    %v89 = vld [vmem:[%s0 + $0x4] sm:$0xf]
    %v91 = vlaneseq
    %v92 = vshrl.u32 %v91, 7
    %v93 = vsub.s32 0, %v92
    %v94 = vrot.slane %v84, %v93
    %v95 = vlaneseq
    %v96 = vshrl.u32 %v95, 7
    %v97 = vsub.s32 1, %v96
    %v98 = vrot.slane %v84, %v97
    %v103 = vunpack.c.l.b16 %v88
    %v104 = vunpack.c.l.b16 %v89
    %v105 = vpack.c.b16 %v104, %v103
    %v107 = vunpack.c.l.b16 %v47
    %v108 = vunpack.c.h.b16 %v47
    %v109 = vpack.c.b16 %v107, %v107
    %v110 = vpack.c.b16 %v108, %v108
    %vm111 = vcmask 64512
    %v113 = vsel %vm111, %v105, 0
    %vm115 = vcmask 1043456
    %v117 = vsel %vm115, %v109, 0
    %v120 = vsel %vm115, %v110, 0
    %122 = vmatprep.subr.bf16.mxu0 0
    %123 = vmatpush1.bf16.msra.mxu0 0
    %124 = vmatprep.subr.bf16.mxu0 0
    %125 = vmatpush1.bf16.msra.mxu0 0
    %126 = vmatprep.subr.bf16.mxu0 0
    %127 = vmatpush1.bf16.msra.mxu0 0
    %128 = vmatprep.subr.bf16.mxu0 0
    %129 = vmatpush1.bf16.msra.mxu0 0
    %130 = vmatprep.subr.bf16.mxu0 0
    %131 = vmatpush1.bf16.msra.mxu0 0
    %132 = vmatprep.subr.bf16.mxu0 0
    %133 = vmatpush1.bf16.msra.mxu0 0
    %134 = vmatprep.subr.bf16.mxu0 0
    %135 = vmatpush1.bf16.msra.mxu0 0
    %136 = vmatprep.subr.bf16.mxu0 %v120
    %137 = vmatpush1.bf16.msra.mxu0 %v117
    %138 = vmatprep.subr.bf16.mxu0 0
    %139 = vmatpush2.bf16.msra.mxu0 0
    %140 = vmatprep.subr.bf16.mxu0 0
    %141 = vmatpush2.bf16.msra.mxu0 0
    %142 = vmatprep.subr.bf16.mxu0 0
    %143 = vmatpush2.bf16.msra.mxu0 0
    %144 = vmatprep.subr.bf16.mxu0 0
    %145 = vmatpush2.bf16.msra.mxu0 0
    %146 = vmatprep.subr.bf16.mxu0 0
    %147 = vmatpush2.bf16.msra.mxu0 0
    %148 = vmatprep.subr.bf16.mxu0 0
    %149 = vmatpush2.bf16.msra.mxu0 0
    %150 = vmatprep.subr.bf16.mxu0 0
    %151 = vmatpush2.bf16.msra.mxu0 0
    %152 = vmatprep.subr.bf16.mxu0 0
    %153 = vmatpush2.bf16.msra.mxu0 0
    %154 = vmatprep.mubr.bf16.mxu0 0
    %155 = vmatmul.mubr.bf16.gmra.mxu0 %v113
    %v156 = vpop.f32.mrf.mxu0
    %v157 = vadd.f32 %v94, %v156
    %v158 = vpop.f32.mrf.mxu0
    %v159 = vadd.f32 %v98, %v158
    %v160 = vpop.f32.mrf.mxu0
    %v161 = vadd.f32 %v94, %v160
    %v162 = vpop.f32.mrf.mxu0
    %v163 = vadd.f32 %v98, %v162
    %164 = vdwg.mxu0
    %v165 = vxor.u32 %v157, 2147483648
    %v166 = vxor.u32 %v159, 2147483648
    %v167 = vmul.f32 %v165, 1.442695
    %v168 = vpow.pop %v167
    %v169 = vmul.f32 %v166, 1.442695
    %v170 = vpow.pop %v169
    %v171 = vadd.f32 %v168, 1.0
    %v172 = vadd.f32 %v170, 1.0
    %v173 = vrcp.pop %v171
    %v174 = vmul.f32 1.0, %v173
    %v175 = vrcp.pop %v172
    %v176 = vmul.f32 1.0, %v175
    %v177 = vtanh.pop %v159
    %v178 = vmul.f32 %v174, 0.0
    %v179 = vmul.f32 %v174, %v177
    %181 = vrot.lane.b32.xlu0 %v179, 64
    %v182 = vpop.permute.xlu0 %181
    %v184 = vadd.f32 %v178, %v182
    %v185 = vtanh.pop %v184
    %v186 = vmul.f32 %v176, %v185
    %v187 = vpack.c.bf16 %v186, %v186
    %189 = vrot.lane.b32.xlu0 %v187, 64
    %v190 = vpop.permute.xlu0 %189
    %v199 = vunpack.c.l.b16 %v48
    %v200 = vunpack.c.h.b16 %v48
    %v201 = vunpack.c.l.b16 %v49
    %v202 = vunpack.c.h.b16 %v49
    %v203 = vunpack.c.l.b16 %v50
    %v204 = vunpack.c.h.b16 %v50
    %v205 = vunpack.c.l.b16 %v51
    %v206 = vunpack.c.h.b16 %v51
    %v207 = vunpack.c.l.b16 %v52
    %v208 = vunpack.c.h.b16 %v52
    %v209 = vunpack.c.l.b16 %v53
    %v210 = vunpack.c.h.b16 %v53
    %v211 = vunpack.c.l.b16 %v54
    %v212 = vunpack.c.h.b16 %v54
    %v213 = vunpack.c.l.b16 %v55
    %v214 = vunpack.c.h.b16 %v55
    %v215 = vpack.c.b16 %v201, %v199
    %v216 = vpack.c.b16 %v202, %v200
    %v217 = vpack.c.b16 %v205, %v203
    %v218 = vpack.c.b16 %v206, %v204
    %v219 = vpack.c.b16 %v209, %v207
    %v220 = vpack.c.b16 %v210, %v208
    %v221 = vpack.c.b16 %v213, %v211
    %v222 = vpack.c.b16 %v214, %v212
    %vm231 = vcmask 523264
    %v233 = vsel %vm231, %v190, 0
    %235 = vmatprep.subr.bf16.mxu0 0
    %236 = vmatpush1.bf16.msra.mxu0 0
    %237 = vmatprep.subr.bf16.mxu0 0
    %238 = vmatpush1.bf16.msra.mxu0 0
    %239 = vmatprep.subr.bf16.mxu0 0
    %240 = vmatpush1.bf16.msra.mxu0 0
    %241 = vmatprep.subr.bf16.mxu0 0
    %242 = vmatpush1.bf16.msra.mxu0 0
    %243 = vmatprep.subr.bf16.mxu0 %v222
    %244 = vmatpush1.bf16.msra.mxu0 %v221
    %245 = vmatprep.subr.bf16.mxu0 %v220
    %246 = vmatpush1.bf16.msra.mxu0 %v219
    %247 = vmatprep.subr.bf16.mxu0 %v218
    %248 = vmatpush1.bf16.msra.mxu0 %v217
    %249 = vmatprep.subr.bf16.mxu0 %v216
    %250 = vmatpush1.bf16.msra.mxu0 %v215
    %251 = vmatprep.subr.bf16.mxu0 0
    %252 = vmatpush2.bf16.msra.mxu0 0
    %253 = vmatprep.subr.bf16.mxu0 0
    %254 = vmatpush2.bf16.msra.mxu0 0
    %255 = vmatprep.subr.bf16.mxu0 0
    %256 = vmatpush2.bf16.msra.mxu0 0
    %257 = vmatprep.subr.bf16.mxu0 0
    %258 = vmatpush2.bf16.msra.mxu0 0
    %259 = vmatprep.subr.bf16.mxu0 0
    %260 = vmatpush2.bf16.msra.mxu0 0
    %261 = vmatprep.subr.bf16.mxu0 0
    %262 = vmatpush2.bf16.msra.mxu0 0
    %263 = vmatprep.subr.bf16.mxu0 0
    %264 = vmatpush2.bf16.msra.mxu0 0
    %265 = vmatprep.subr.bf16.mxu0 0
    %266 = vmatpush2.bf16.msra.mxu0 0
    %267 = vmatprep.mubr.bf16.mxu0 0
    %268 = vmatmul.mubr.bf16.gmra.mxu0 %v233
    %v269 = vpop.f32.mrf.mxu0
    %v270 = vadd.f32 0.0, %v269
    %v271 = vpop.f32.mrf.mxu0
    %v272 = vadd.f32 0.0, %v271
    %v273 = vpop.f32.mrf.mxu0
    %v274 = vpop.f32.mrf.mxu0
    %275 = vdwg.mxu0
    %v278 = vrot.slane %v270, 6
    %v279 = vrot.slane %v272, 6
    %v282 = vadd.f32 %v157, %v278
    %v283 = vadd.f32 %v159, %v279
    %v284 = vxor.u32 %v282, 2147483648
    %v285 = vxor.u32 %v283, 2147483648
    %v286 = vmul.f32 %v284, 1.442695
    %v287 = vpow.pop %v286
    %v288 = vmul.f32 %v285, 1.442695
    %v289 = vpow.pop %v288
    %v290 = vadd.f32 %v287, 1.0
    %v291 = vadd.f32 %v289, 1.0
    %v292 = vrcp.pop %v290
    %v293 = vmul.f32 1.0, %v292
    %v294 = vrcp.pop %v291
    %v295 = vmul.f32 1.0, %v294
    %v296 = vtanh.pop %v283
    %v298 = vrot.slane %v184, 6
    %v300 = vmul.f32 %v293, %v298
    %v301 = vmul.f32 %v293, %v296
    %303 = vrot.lane.b32.xlu0 %v301, 64
    %v304 = vpop.permute.xlu0 %303
    %v306 = vadd.f32 %v300, %v304
    %v307 = vtanh.pop %v306
    %v308 = vmul.f32 %v295, %v307
    %v309 = vpack.c.bf16 %v308, %v308
    %v311 = vrot.slane %v309, 1
    %312 = vrot.lane.b32.xlu0 %v311, 64
    %v313 = vpop.permute.xlu0 %312
    %v315 = vsel %vm231, %v313, 0
    %317 = vmatprep.subr.bf16.mxu0 0
    %318 = vmatpush1.bf16.msra.mxu0 0
    %319 = vmatprep.subr.bf16.mxu0 0
    %320 = vmatpush1.bf16.msra.mxu0 0
    %321 = vmatprep.subr.bf16.mxu0 0
    %322 = vmatpush1.bf16.msra.mxu0 0
    %323 = vmatprep.subr.bf16.mxu0 0
    %324 = vmatpush1.bf16.msra.mxu0 0
    %325 = vmatprep.subr.bf16.mxu0 %v222
    %326 = vmatpush1.bf16.msra.mxu0 %v221
    %327 = vmatprep.subr.bf16.mxu0 %v220
    %328 = vmatpush1.bf16.msra.mxu0 %v219
    %329 = vmatprep.subr.bf16.mxu0 %v218
    %330 = vmatpush1.bf16.msra.mxu0 %v217
    %331 = vmatprep.subr.bf16.mxu0 %v216
    %332 = vmatpush1.bf16.msra.mxu0 %v215
    %333 = vmatprep.subr.bf16.mxu0 0
    %334 = vmatpush2.bf16.msra.mxu0 0
    %335 = vmatprep.subr.bf16.mxu0 0
    %336 = vmatpush2.bf16.msra.mxu0 0
    %337 = vmatprep.subr.bf16.mxu0 0
    %338 = vmatpush2.bf16.msra.mxu0 0
    %339 = vmatprep.subr.bf16.mxu0 0
    %340 = vmatpush2.bf16.msra.mxu0 0
    %341 = vmatprep.subr.bf16.mxu0 0
    %342 = vmatpush2.bf16.msra.mxu0 0
    %343 = vmatprep.subr.bf16.mxu0 0
    %344 = vmatpush2.bf16.msra.mxu0 0
    %345 = vmatprep.subr.bf16.mxu0 0
    %346 = vmatpush2.bf16.msra.mxu0 0
    %347 = vmatprep.subr.bf16.mxu0 0
    %348 = vmatpush2.bf16.msra.mxu0 0
    %349 = vmatprep.mubr.bf16.mxu0 0
    %350 = vmatmul.mubr.bf16.gmra.mxu0 %v315
    %v351 = vpop.f32.mrf.mxu0
    %v352 = vadd.f32 0.0, %v351
    %v353 = vpop.f32.mrf.mxu0
    %v354 = vadd.f32 0.0, %v353
    %v355 = vpop.f32.mrf.mxu0
    %v356 = vpop.f32.mrf.mxu0
    %357 = vdwg.mxu0
    %v360 = vrot.slane %v352, 4
    %v361 = vrot.slane %v354, 4
    %v364 = vadd.f32 %v157, %v360
    %v365 = vadd.f32 %v159, %v361
    %v366 = vxor.u32 %v364, 2147483648
    %v367 = vxor.u32 %v365, 2147483648
    %v368 = vmul.f32 %v366, 1.442695
    %v369 = vpow.pop %v368
    %v370 = vmul.f32 %v367, 1.442695
    %v371 = vpow.pop %v370
    %v372 = vadd.f32 %v369, 1.0
    %v373 = vadd.f32 %v371, 1.0
    %v374 = vrcp.pop %v372
    %v375 = vmul.f32 1.0, %v374
    %v376 = vrcp.pop %v373
    %v377 = vmul.f32 1.0, %v376
    %v378 = vtanh.pop %v365
    %v380 = vrot.slane %v306, 6
    %v382 = vmul.f32 %v375, %v380
    %v383 = vmul.f32 %v375, %v378
    %385 = vrot.lane.b32.xlu0 %v383, 64
    %v386 = vpop.permute.xlu0 %385
    %v388 = vadd.f32 %v382, %v386
    %v389 = vtanh.pop %v388
    %v390 = vmul.f32 %v377, %v389
    %v391 = vpack.c.bf16 %v390, %v390
    %v393 = vrot.slane %v391, 2
    %394 = vrot.lane.b32.xlu0 %v393, 64
    %v395 = vpop.permute.xlu0 %394
    %v397 = vsel %vm231, %v395, 0
    %399 = vmatprep.subr.bf16.mxu0 0
    %400 = vmatpush1.bf16.msra.mxu0 0
    %401 = vmatprep.subr.bf16.mxu0 0
    %402 = vmatpush1.bf16.msra.mxu0 0
    %403 = vmatprep.subr.bf16.mxu0 0
    %404 = vmatpush1.bf16.msra.mxu0 0
    %405 = vmatprep.subr.bf16.mxu0 0
    %406 = vmatpush1.bf16.msra.mxu0 0
    %407 = vmatprep.subr.bf16.mxu0 %v222
    %408 = vmatpush1.bf16.msra.mxu0 %v221
    %409 = vmatprep.subr.bf16.mxu0 %v220
    %410 = vmatpush1.bf16.msra.mxu0 %v219
    %411 = vmatprep.subr.bf16.mxu0 %v218
    %412 = vmatpush1.bf16.msra.mxu0 %v217
    %413 = vmatprep.subr.bf16.mxu0 %v216
    %414 = vmatpush1.bf16.msra.mxu0 %v215
    %415 = vmatprep.subr.bf16.mxu0 0
    %416 = vmatpush2.bf16.msra.mxu0 0
    %417 = vmatprep.subr.bf16.mxu0 0
    %418 = vmatpush2.bf16.msra.mxu0 0
    %419 = vmatprep.subr.bf16.mxu0 0
    %420 = vmatpush2.bf16.msra.mxu0 0
    %421 = vmatprep.subr.bf16.mxu0 0
    %422 = vmatpush2.bf16.msra.mxu0 0
    %423 = vmatprep.subr.bf16.mxu0 0
    %424 = vmatpush2.bf16.msra.mxu0 0
    %425 = vmatprep.subr.bf16.mxu0 0
    %426 = vmatpush2.bf16.msra.mxu0 0
    %427 = vmatprep.subr.bf16.mxu0 0
    %428 = vmatpush2.bf16.msra.mxu0 0
    %429 = vmatprep.subr.bf16.mxu0 0
    %430 = vmatpush2.bf16.msra.mxu0 0
    %431 = vmatprep.mubr.bf16.mxu0 0
    %432 = vmatmul.mubr.bf16.gmra.mxu0 %v397
    %v433 = vpop.f32.mrf.mxu0
    %v434 = vadd.f32 0.0, %v433
    %v435 = vpop.f32.mrf.mxu0
    %v436 = vadd.f32 0.0, %v435
    %v437 = vpop.f32.mrf.mxu0
    %v438 = vpop.f32.mrf.mxu0
    %439 = vdwg.mxu0
    %v442 = vrot.slane %v434, 2
    %v443 = vrot.slane %v436, 2
    %v446 = vadd.f32 %v157, %v442
    %v447 = vadd.f32 %v159, %v443
    %v448 = vxor.u32 %v446, 2147483648
    %v449 = vxor.u32 %v447, 2147483648
    %v450 = vmul.f32 %v448, 1.442695
    %v451 = vpow.pop %v450
    %v452 = vmul.f32 %v449, 1.442695
    %v453 = vpow.pop %v452
    %v454 = vadd.f32 %v451, 1.0
    %v455 = vadd.f32 %v453, 1.0
    %v456 = vrcp.pop %v454
    %v457 = vmul.f32 1.0, %v456
    %v458 = vrcp.pop %v455
    %v459 = vmul.f32 1.0, %v458
    %v460 = vtanh.pop %v447
    %v462 = vrot.slane %v388, 6
    %v464 = vmul.f32 %v457, %v462
    %v465 = vmul.f32 %v457, %v460
    %467 = vrot.lane.b32.xlu0 %v465, 64
    %v468 = vpop.permute.xlu0 %467
    %v470 = vadd.f32 %v464, %v468
    %v471 = vtanh.pop %v470
    %v472 = vmul.f32 %v459, %v471
    %v473 = vpack.c.bf16 %v472, %v472
    %v475 = vrot.slane %v473, 3
    %476 = vrot.lane.b32.xlu0 %v475, 64
    %v477 = vpop.permute.xlu0 %476
    %v479 = vsel %vm231, %v477, 0
    %481 = vmatprep.subr.bf16.mxu0 0
    %482 = vmatpush1.bf16.msra.mxu0 0
    %483 = vmatprep.subr.bf16.mxu0 0
    %484 = vmatpush1.bf16.msra.mxu0 0
    %485 = vmatprep.subr.bf16.mxu0 0
    %486 = vmatpush1.bf16.msra.mxu0 0
    %487 = vmatprep.subr.bf16.mxu0 0
    %488 = vmatpush1.bf16.msra.mxu0 0
    %489 = vmatprep.subr.bf16.mxu0 %v222
    %490 = vmatpush1.bf16.msra.mxu0 %v221
    %491 = vmatprep.subr.bf16.mxu0 %v220
    %492 = vmatpush1.bf16.msra.mxu0 %v219
    %493 = vmatprep.subr.bf16.mxu0 %v218
    %494 = vmatpush1.bf16.msra.mxu0 %v217
    %495 = vmatprep.subr.bf16.mxu0 %v216
    %496 = vmatpush1.bf16.msra.mxu0 %v215
    %497 = vmatprep.subr.bf16.mxu0 0
    %498 = vmatpush2.bf16.msra.mxu0 0
    %499 = vmatprep.subr.bf16.mxu0 0
    %500 = vmatpush2.bf16.msra.mxu0 0
    %501 = vmatprep.subr.bf16.mxu0 0
    %502 = vmatpush2.bf16.msra.mxu0 0
    %503 = vmatprep.subr.bf16.mxu0 0
    %504 = vmatpush2.bf16.msra.mxu0 0
    %505 = vmatprep.subr.bf16.mxu0 0
    %506 = vmatpush2.bf16.msra.mxu0 0
    %507 = vmatprep.subr.bf16.mxu0 0
    %508 = vmatpush2.bf16.msra.mxu0 0
    %509 = vmatprep.subr.bf16.mxu0 0
    %510 = vmatpush2.bf16.msra.mxu0 0
    %511 = vmatprep.subr.bf16.mxu0 0
    %512 = vmatpush2.bf16.msra.mxu0 0
    %513 = vmatprep.mubr.bf16.mxu0 0
    %514 = vmatmul.mubr.bf16.gmra.mxu0 %v479
    %v515 = vpop.f32.mrf.mxu0
    %v516 = vadd.f32 0.0, %v515
    %v517 = vpop.f32.mrf.mxu0
    %v518 = vadd.f32 0.0, %v517
    %v519 = vpop.f32.mrf.mxu0
    %v520 = vpop.f32.mrf.mxu0
    %521 = vdwg.mxu0
    %v522 = vadd.f32 %v161, %v516
    %v523 = vadd.f32 %v163, %v518
    %v524 = vxor.u32 %v522, 2147483648
    %v525 = vxor.u32 %v523, 2147483648
    %v526 = vmul.f32 %v524, 1.442695
    %v527 = vpow.pop %v526
    %v528 = vmul.f32 %v525, 1.442695
    %v529 = vpow.pop %v528
    %v530 = vadd.f32 %v527, 1.0
    %v531 = vadd.f32 %v529, 1.0
    %v532 = vrcp.pop %v530
    %v533 = vmul.f32 1.0, %v532
    %v534 = vrcp.pop %v531
    %v535 = vmul.f32 1.0, %v534
    %v536 = vtanh.pop %v523
    %v538 = vrot.slane %v470, 6
    %v540 = vmul.f32 %v533, %v538
    %v541 = vmul.f32 %v533, %v536
    %543 = vrot.lane.b32.xlu0 %v541, 64
    %v544 = vpop.permute.xlu0 %543
    %v546 = vadd.f32 %v540, %v544
    %v547 = vtanh.pop %v546
    %v548 = vmul.f32 %v535, %v547
    %v549 = vpack.c.bf16 %v548, %v548
    %551 = vrot.lane.b32.xlu0 %v549, 64
    %v552 = vpop.permute.xlu0 %551
    %v554 = vsel %vm231, %v552, 0
    %556 = vmatprep.subr.bf16.mxu0 0
    %557 = vmatpush1.bf16.msra.mxu0 0
    %558 = vmatprep.subr.bf16.mxu0 0
    %559 = vmatpush1.bf16.msra.mxu0 0
    %560 = vmatprep.subr.bf16.mxu0 0
    %561 = vmatpush1.bf16.msra.mxu0 0
    %562 = vmatprep.subr.bf16.mxu0 0
    %563 = vmatpush1.bf16.msra.mxu0 0
    %564 = vmatprep.subr.bf16.mxu0 %v222
    %565 = vmatpush1.bf16.msra.mxu0 %v221
    %566 = vmatprep.subr.bf16.mxu0 %v220
    %567 = vmatpush1.bf16.msra.mxu0 %v219
    %568 = vmatprep.subr.bf16.mxu0 %v218
    %569 = vmatpush1.bf16.msra.mxu0 %v217
    %570 = vmatprep.subr.bf16.mxu0 %v216
    %571 = vmatpush1.bf16.msra.mxu0 %v215
    %572 = vmatprep.subr.bf16.mxu0 0
    %573 = vmatpush2.bf16.msra.mxu0 0
    %574 = vmatprep.subr.bf16.mxu0 0
    %575 = vmatpush2.bf16.msra.mxu0 0
    %576 = vmatprep.subr.bf16.mxu0 0
    %577 = vmatpush2.bf16.msra.mxu0 0
    %578 = vmatprep.subr.bf16.mxu0 0
    %579 = vmatpush2.bf16.msra.mxu0 0
    %580 = vmatprep.subr.bf16.mxu0 0
    %581 = vmatpush2.bf16.msra.mxu0 0
    %582 = vmatprep.subr.bf16.mxu0 0
    %583 = vmatpush2.bf16.msra.mxu0 0
    %584 = vmatprep.subr.bf16.mxu0 0
    %585 = vmatpush2.bf16.msra.mxu0 0
    %586 = vmatprep.subr.bf16.mxu0 0
    %587 = vmatpush2.bf16.msra.mxu0 0
    %588 = vmatprep.mubr.bf16.mxu0 0
    %589 = vmatmul.mubr.bf16.gmra.mxu0 %v554
    %v590 = vpop.f32.mrf.mxu0
    %v591 = vadd.f32 0.0, %v590
    %v592 = vpop.f32.mrf.mxu0
    %v593 = vadd.f32 0.0, %v592
    %v594 = vpop.f32.mrf.mxu0
    %v595 = vpop.f32.mrf.mxu0
    %596 = vdwg.mxu0
    %v599 = vrot.slane %v591, 6
    %v600 = vrot.slane %v593, 6
    %v603 = vadd.f32 %v161, %v599
    %v604 = vadd.f32 %v163, %v600
    %v605 = vxor.u32 %v603, 2147483648
    %v606 = vxor.u32 %v604, 2147483648
    %v607 = vmul.f32 %v605, 1.442695
    %v608 = vpow.pop %v607
    %v609 = vmul.f32 %v606, 1.442695
    %v610 = vpow.pop %v609
    %v611 = vadd.f32 %v608, 1.0
    %v612 = vadd.f32 %v610, 1.0
    %v613 = vrcp.pop %v611
    %v614 = vmul.f32 1.0, %v613
    %v615 = vrcp.pop %v612
    %v616 = vmul.f32 1.0, %v615
    %v617 = vtanh.pop %v604
    %v619 = vrot.slane %v546, 6
    %v621 = vmul.f32 %v614, %v619
    %v622 = vmul.f32 %v614, %v617
    %624 = vrot.lane.b32.xlu0 %v622, 64
    %v625 = vpop.permute.xlu0 %624
    %v627 = vadd.f32 %v621, %v625
    %v628 = vtanh.pop %v627
    %v629 = vmul.f32 %v616, %v628
    %v630 = vpack.c.bf16 %v629, %v629
    %v632 = vrot.slane %v630, 1
    %633 = vrot.lane.b32.xlu0 %v632, 64
    %v634 = vpop.permute.xlu0 %633
    %v636 = vsel %vm231, %v634, 0
    %638 = vmatprep.subr.bf16.mxu0 0
    %639 = vmatpush1.bf16.msra.mxu0 0
    %640 = vmatprep.subr.bf16.mxu0 0
    %641 = vmatpush1.bf16.msra.mxu0 0
    %642 = vmatprep.subr.bf16.mxu0 0
    %643 = vmatpush1.bf16.msra.mxu0 0
    %644 = vmatprep.subr.bf16.mxu0 0
    %645 = vmatpush1.bf16.msra.mxu0 0
    %646 = vmatprep.subr.bf16.mxu0 %v222
    %647 = vmatpush1.bf16.msra.mxu0 %v221
    %648 = vmatprep.subr.bf16.mxu0 %v220
    %649 = vmatpush1.bf16.msra.mxu0 %v219
    %650 = vmatprep.subr.bf16.mxu0 %v218
    %651 = vmatpush1.bf16.msra.mxu0 %v217
    %652 = vmatprep.subr.bf16.mxu0 %v216
    %653 = vmatpush1.bf16.msra.mxu0 %v215
    %654 = vmatprep.subr.bf16.mxu0 0
    %655 = vmatpush2.bf16.msra.mxu0 0
    %656 = vmatprep.subr.bf16.mxu0 0
    %657 = vmatpush2.bf16.msra.mxu0 0
    %658 = vmatprep.subr.bf16.mxu0 0
    %659 = vmatpush2.bf16.msra.mxu0 0
    %660 = vmatprep.subr.bf16.mxu0 0
    %661 = vmatpush2.bf16.msra.mxu0 0
    %662 = vmatprep.subr.bf16.mxu0 0
    %663 = vmatpush2.bf16.msra.mxu0 0
    %664 = vmatprep.subr.bf16.mxu0 0
    %665 = vmatpush2.bf16.msra.mxu0 0
    %666 = vmatprep.subr.bf16.mxu0 0
    %667 = vmatpush2.bf16.msra.mxu0 0
    %668 = vmatprep.subr.bf16.mxu0 0
    %669 = vmatpush2.bf16.msra.mxu0 0
    %670 = vmatprep.mubr.bf16.mxu0 0
    %671 = vmatmul.mubr.bf16.gmra.mxu0 %v636
    %v672 = vpop.f32.mrf.mxu0
    %v673 = vadd.f32 0.0, %v672
    %v674 = vpop.f32.mrf.mxu0
    %v675 = vadd.f32 0.0, %v674
    %v676 = vpop.f32.mrf.mxu0
    %v677 = vpop.f32.mrf.mxu0
    %678 = vdwg.mxu0
    %v681 = vrot.slane %v673, 4
    %v682 = vrot.slane %v675, 4
    %v685 = vadd.f32 %v161, %v681
    %v686 = vadd.f32 %v163, %v682
    %v687 = vxor.u32 %v685, 2147483648
    %v688 = vxor.u32 %v686, 2147483648
    %v689 = vmul.f32 %v687, 1.442695
    %v690 = vpow.pop %v689
    %v691 = vmul.f32 %v688, 1.442695
    %v692 = vpow.pop %v691
    %v693 = vadd.f32 %v690, 1.0
    %v694 = vadd.f32 %v692, 1.0
    %v695 = vrcp.pop %v693
    %v696 = vmul.f32 1.0, %v695
    %v697 = vrcp.pop %v694
    %v698 = vmul.f32 1.0, %v697
    %v699 = vtanh.pop %v686
    %v701 = vrot.slane %v627, 6
    %v703 = vmul.f32 %v696, %v701
    %v704 = vmul.f32 %v696, %v699
    %706 = vrot.lane.b32.xlu0 %v704, 64
    %v707 = vpop.permute.xlu0 %706
    %v709 = vadd.f32 %v703, %v707
    %v710 = vtanh.pop %v709
    %v711 = vmul.f32 %v698, %v710
    %v712 = vpack.c.bf16 %v711, %v711
    %v714 = vrot.slane %v712, 2
    %715 = vrot.lane.b32.xlu0 %v714, 64
    %v716 = vpop.permute.xlu0 %715
    %v718 = vsel %vm231, %v716, 0
    %720 = vmatprep.subr.bf16.mxu0 0
    %721 = vmatpush1.bf16.msra.mxu0 0
    %722 = vmatprep.subr.bf16.mxu0 0
    %723 = vmatpush1.bf16.msra.mxu0 0
    %724 = vmatprep.subr.bf16.mxu0 0
    %725 = vmatpush1.bf16.msra.mxu0 0
    %726 = vmatprep.subr.bf16.mxu0 0
    %727 = vmatpush1.bf16.msra.mxu0 0
    %728 = vmatprep.subr.bf16.mxu0 %v222
    %729 = vmatpush1.bf16.msra.mxu0 %v221
    %730 = vmatprep.subr.bf16.mxu0 %v220
    %731 = vmatpush1.bf16.msra.mxu0 %v219
    %732 = vmatprep.subr.bf16.mxu0 %v218
    %733 = vmatpush1.bf16.msra.mxu0 %v217
    %734 = vmatprep.subr.bf16.mxu0 %v216
    %735 = vmatpush1.bf16.msra.mxu0 %v215
    %736 = vmatprep.subr.bf16.mxu0 0
    %737 = vmatpush2.bf16.msra.mxu0 0
    %738 = vmatprep.subr.bf16.mxu0 0
    %739 = vmatpush2.bf16.msra.mxu0 0
    %740 = vmatprep.subr.bf16.mxu0 0
    %741 = vmatpush2.bf16.msra.mxu0 0
    %742 = vmatprep.subr.bf16.mxu0 0
    %743 = vmatpush2.bf16.msra.mxu0 0
    %744 = vmatprep.subr.bf16.mxu0 0
    %745 = vmatpush2.bf16.msra.mxu0 0
    %746 = vmatprep.subr.bf16.mxu0 0
    %747 = vmatpush2.bf16.msra.mxu0 0
    %748 = vmatprep.subr.bf16.mxu0 0
    %749 = vmatpush2.bf16.msra.mxu0 0
    %750 = vmatprep.subr.bf16.mxu0 0
    %751 = vmatpush2.bf16.msra.mxu0 0
    %752 = vmatprep.mubr.bf16.mxu0 0
    %753 = vmatmul.mubr.bf16.gmra.mxu0 %v718
    %v754 = vpop.f32.mrf.mxu0
    %v755 = vadd.f32 0.0, %v754
    %v756 = vpop.f32.mrf.mxu0
    %v757 = vadd.f32 0.0, %v756
    %v758 = vpop.f32.mrf.mxu0
    %v759 = vpop.f32.mrf.mxu0
    %760 = vdwg.mxu0
    %v763 = vrot.slane %v755, 2
    %v764 = vrot.slane %v757, 2
    %v767 = vadd.f32 %v161, %v763
    %v768 = vadd.f32 %v163, %v764
    %v769 = vxor.u32 %v767, 2147483648
    %v770 = vxor.u32 %v768, 2147483648
    %v771 = vmul.f32 %v769, 1.442695
    %v772 = vpow.pop %v771
    %v773 = vmul.f32 %v770, 1.442695
    %v774 = vpow.pop %v773
    %v775 = vadd.f32 %v772, 1.0
    %v776 = vadd.f32 %v774, 1.0
    %v777 = vrcp.pop %v775
    %v778 = vmul.f32 1.0, %v777
    %v779 = vrcp.pop %v776
    %v780 = vmul.f32 1.0, %v779
    %v781 = vtanh.pop %v768
    %v783 = vrot.slane %v709, 6
    %v785 = vmul.f32 %v778, %v783
    %v786 = vmul.f32 %v778, %v781
    %788 = vrot.lane.b32.xlu0 %v786, 64
    %v789 = vpop.permute.xlu0 %788
    %v791 = vadd.f32 %v785, %v789
    %v792 = vtanh.pop %v791
    %v793 = vmul.f32 %v780, %v792
    %795 = vrot.lane.b32.xlu0 %v186, 64
    %v796 = vpop.permute.xlu0 %795
    %v799 = vrot.slane %v793, 6
    %800 = vrot.lane.b32.xlu0 %v799, 64
    %v801 = vpop.permute.xlu0 %800
    %vm803 = vcmask 261120
    %v804 = vsel %vm803, %v796, %v801
    %806 = vrot.lane.b32.xlu0 %v308, 64
    %v807 = vpop.permute.xlu0 %806
    %v810 = vrot.slane %v711, 2
    %811 = vrot.lane.b32.xlu0 %v810, 64
    %v812 = vpop.permute.xlu0 %811
    %v814 = vsel %vm803, %v807, %v812
    %816 = vrot.lane.b32.xlu0 %v390, 64
    %v817 = vpop.permute.xlu0 %816
    %v820 = vrot.slane %v629, 6
    %821 = vrot.lane.b32.xlu0 %v820, 64
    %v822 = vpop.permute.xlu0 %821
    %v824 = vsel %vm803, %v817, %v822
    %826 = vrot.lane.b32.xlu0 %v472, 64
    %v827 = vpop.permute.xlu0 %826
    %v830 = vrot.slane %v548, 2
    %831 = vrot.lane.b32.xlu0 %v830, 64
    %v832 = vpop.permute.xlu0 %831
    %v834 = vsel %vm803, %v827, %v832
    %835 = vrot.lane.b32.xlu0 %v548, 64
    %v836 = vpop.permute.xlu0 %835
    %v838 = vrot.slane %v472, 6
    %839 = vrot.lane.b32.xlu0 %v838, 64
    %v840 = vpop.permute.xlu0 %839
    %v842 = vsel %vm803, %v836, %v840
    %843 = vrot.lane.b32.xlu0 %v629, 64
    %v844 = vpop.permute.xlu0 %843
    %v846 = vrot.slane %v390, 2
    %847 = vrot.lane.b32.xlu0 %v846, 64
    %v848 = vpop.permute.xlu0 %847
    %v850 = vsel %vm803, %v844, %v848
    %851 = vrot.lane.b32.xlu0 %v711, 64
    %v852 = vpop.permute.xlu0 %851
    %v854 = vrot.slane %v308, 6
    %855 = vrot.lane.b32.xlu0 %v854, 64
    %v856 = vpop.permute.xlu0 %855
    %v858 = vsel %vm803, %v852, %v856
    %859 = vrot.lane.b32.xlu0 %v793, 64
    %v860 = vpop.permute.xlu0 %859
    %v862 = vrot.slane %v186, 2
    %863 = vrot.lane.b32.xlu0 %v862, 64
    %v864 = vpop.permute.xlu0 %863
    %v866 = vsel %vm803, %v860, %v864
    %vm867 = vcmask 1041408
    %v868 = vsel %vm867, %v804, %v814
    %v869 = vsel %vm115, %v868, %v824
    %vm870 = vcmask 1045504
    %v871 = vsel %vm870, %v869, %v834
    %v872 = vsel %vm867, %v842, %v850
    %v873 = vsel %vm115, %v872, %v858
    %v874 = vsel %vm870, %v873, %v866
    %v875 = vpack.c.bf16 %v874, %v871
    %v884 = vunpack.c.l.b16 %v56
    %v885 = vunpack.c.l.b16 %v57
    %v886 = vunpack.c.l.b16 %v58
    %v887 = vunpack.c.l.b16 %v59
    %v888 = vunpack.c.l.b16 %v60
    %v889 = vunpack.c.l.b16 %v61
    %v890 = vunpack.c.l.b16 %v62
    %v891 = vunpack.c.l.b16 %v63
    %v892 = vpack.c.b16 %v885, %v884
    %v893 = vpack.c.b16 %v887, %v886
    %v894 = vpack.c.b16 %v889, %v888
    %v895 = vpack.c.b16 %v891, %v890
    %v901 = vsel %vm231, %v875, 0
    %903 = vmatprep.subr.bf16.mxu0 0
    %904 = vmatpush1.bf16.msra.mxu0 0
    %905 = vmatprep.subr.bf16.mxu0 0
    %906 = vmatpush1.bf16.msra.mxu0 0
    %907 = vmatprep.subr.bf16.mxu0 0
    %908 = vmatpush1.bf16.msra.mxu0 0
    %909 = vmatprep.subr.bf16.mxu0 0
    %910 = vmatpush1.bf16.msra.mxu0 0
    %911 = vmatprep.subr.bf16.mxu0 0
    %912 = vmatpush1.bf16.msra.mxu0 %v895
    %913 = vmatprep.subr.bf16.mxu0 0
    %914 = vmatpush1.bf16.msra.mxu0 %v894
    %915 = vmatprep.subr.bf16.mxu0 0
    %916 = vmatpush1.bf16.msra.mxu0 %v893
    %917 = vmatprep.subr.bf16.mxu0 0
    %918 = vmatpush1.bf16.msra.mxu0 %v892
    %919 = vmatprep.subr.bf16.mxu0 0
    %920 = vmatpush2.bf16.msra.mxu0 0
    %921 = vmatprep.subr.bf16.mxu0 0
    %922 = vmatpush2.bf16.msra.mxu0 0
    %923 = vmatprep.subr.bf16.mxu0 0
    %924 = vmatpush2.bf16.msra.mxu0 0
    %925 = vmatprep.subr.bf16.mxu0 0
    %926 = vmatpush2.bf16.msra.mxu0 0
    %927 = vmatprep.subr.bf16.mxu0 0
    %928 = vmatpush2.bf16.msra.mxu0 0
    %929 = vmatprep.subr.bf16.mxu0 0
    %930 = vmatpush2.bf16.msra.mxu0 0
    %931 = vmatprep.subr.bf16.mxu0 0
    %932 = vmatpush2.bf16.msra.mxu0 0
    %933 = vmatprep.subr.bf16.mxu0 0
    %934 = vmatpush2.bf16.msra.mxu0 0
    %935 = vmatprep.mubr.bf16.mxu0 0
    %936 = vmatmul.mubr.bf16.gmra.mxu0 %v901
    %v937 = vpop.f32.mrf.mxu0
    %v938 = vadd.f32 %v85, %v937
    %v939 = vpop.f32.mrf.mxu0
    %v940 = vpop.f32.mrf.mxu0
    %v941 = vadd.f32 %v85, %v940
    %v942 = vpop.f32.mrf.mxu0
    %943 = vdwg.mxu0
    %v944 = vxor.u32 %v938, 2147483648
    %v945 = vmul.f32 %v944, 1.442695
    %v946 = vpow.pop %v945
    %v947 = vadd.f32 %v946, 1.0
    %v948 = vrcp.pop %v947
    %v949 = vmul.f32 1.0, %v948
    %v950 = vtanh.pop %v938
    %v951 = vmul.f32 %v949, 0.0
    %953 = vrot.lane.b32.xlu0 %v950, 64
    %v954 = vpop.permute.xlu0 %953
    %v956 = vmul.f32 %v949, %v954
    %958 = vrot.lane.b32.xlu0 %v956, 32
    %v959 = vpop.permute.xlu0 %958
    %v961 = vadd.f32 %v951, %v959
    %v962 = vtanh.pop %v961
    %964 = vrot.lane.b32.xlu0 %v962, 64
    %v965 = vpop.permute.xlu0 %964
    %v967 = vmul.f32 %v949, %v965
    %v968 = vpack.c.bf16 %v967, %v967
    %970 = vrot.lane.b32.xlu0 %v968, 32
    %v971 = vpop.permute.xlu0 %970
    %v976 = vunpack.c.l.b16 %v64
    %v977 = vunpack.c.l.b16 %v65
    %v978 = vunpack.c.l.b16 %v66
    %v979 = vunpack.c.l.b16 %v67
    %v980 = vpack.c.b16 %v977, %v976
    %v981 = vpack.c.b16 %v979, %v978
    %v985 = vsel %vm803, %v971, 0
    %987 = vmatprep.subr.bf16.mxu0 0
    %988 = vmatpush1.bf16.msra.mxu0 0
    %989 = vmatprep.subr.bf16.mxu0 0
    %990 = vmatpush1.bf16.msra.mxu0 0
    %991 = vmatprep.subr.bf16.mxu0 0
    %992 = vmatpush1.bf16.msra.mxu0 0
    %993 = vmatprep.subr.bf16.mxu0 0
    %994 = vmatpush1.bf16.msra.mxu0 0
    %995 = vmatprep.subr.bf16.mxu0 0
    %996 = vmatpush1.bf16.msra.mxu0 0
    %997 = vmatprep.subr.bf16.mxu0 0
    %998 = vmatpush1.bf16.msra.mxu0 0
    %999 = vmatprep.subr.bf16.mxu0 0
    %1000 = vmatpush1.bf16.msra.mxu0 %v981
    %1001 = vmatprep.subr.bf16.mxu0 0
    %1002 = vmatpush1.bf16.msra.mxu0 %v980
    %1003 = vmatprep.subr.bf16.mxu0 0
    %1004 = vmatpush2.bf16.msra.mxu0 0
    %1005 = vmatprep.subr.bf16.mxu0 0
    %1006 = vmatpush2.bf16.msra.mxu0 0
    %1007 = vmatprep.subr.bf16.mxu0 0
    %1008 = vmatpush2.bf16.msra.mxu0 0
    %1009 = vmatprep.subr.bf16.mxu0 0
    %1010 = vmatpush2.bf16.msra.mxu0 0
    %1011 = vmatprep.subr.bf16.mxu0 0
    %1012 = vmatpush2.bf16.msra.mxu0 0
    %1013 = vmatprep.subr.bf16.mxu0 0
    %1014 = vmatpush2.bf16.msra.mxu0 0
    %1015 = vmatprep.subr.bf16.mxu0 0
    %1016 = vmatpush2.bf16.msra.mxu0 0
    %1017 = vmatprep.subr.bf16.mxu0 0
    %1018 = vmatpush2.bf16.msra.mxu0 0
    %1019 = vmatprep.mubr.bf16.mxu0 0
    %1020 = vmatmul.mubr.bf16.gmra.mxu0 %v985
    %v1021 = vpop.f32.mrf.mxu0
    %v1022 = vadd.f32 0.0, %v1021
    %v1023 = vpop.f32.mrf.mxu0
    %v1024 = vpop.f32.mrf.mxu0
    %v1025 = vpop.f32.mrf.mxu0
    %1026 = vdwg.mxu0
    %v1028 = vrot.slane %v1022, 6
    %v1030 = vadd.f32 %v938, %v1028
    %v1031 = vxor.u32 %v1030, 2147483648
    %v1032 = vmul.f32 %v1031, 1.442695
    %v1033 = vpow.pop %v1032
    %v1034 = vadd.f32 %v1033, 1.0
    %v1035 = vrcp.pop %v1034
    %v1036 = vmul.f32 1.0, %v1035
    %v1037 = vtanh.pop %v1030
    %v1039 = vrot.slane %v961, 6
    %v1041 = vmul.f32 %v1036, %v1039
    %1043 = vrot.lane.b32.xlu0 %v1037, 64
    %v1044 = vpop.permute.xlu0 %1043
    %v1046 = vmul.f32 %v1036, %v1044
    %1048 = vrot.lane.b32.xlu0 %v1046, 32
    %v1049 = vpop.permute.xlu0 %1048
    %v1051 = vadd.f32 %v1041, %v1049
    %v1052 = vtanh.pop %v1051
    %1054 = vrot.lane.b32.xlu0 %v1052, 64
    %v1055 = vpop.permute.xlu0 %1054
    %v1057 = vmul.f32 %v1036, %v1055
    %v1058 = vpack.c.bf16 %v1057, %v1057
    %v1060 = vrot.slane %v1058, 1
    %1061 = vrot.lane.b32.xlu0 %v1060, 32
    %v1062 = vpop.permute.xlu0 %1061
    %v1064 = vsel %vm803, %v1062, 0
    %1066 = vmatprep.subr.bf16.mxu0 0
    %1067 = vmatpush1.bf16.msra.mxu0 0
    %1068 = vmatprep.subr.bf16.mxu0 0
    %1069 = vmatpush1.bf16.msra.mxu0 0
    %1070 = vmatprep.subr.bf16.mxu0 0
    %1071 = vmatpush1.bf16.msra.mxu0 0
    %1072 = vmatprep.subr.bf16.mxu0 0
    %1073 = vmatpush1.bf16.msra.mxu0 0
    %1074 = vmatprep.subr.bf16.mxu0 0
    %1075 = vmatpush1.bf16.msra.mxu0 0
    %1076 = vmatprep.subr.bf16.mxu0 0
    %1077 = vmatpush1.bf16.msra.mxu0 0
    %1078 = vmatprep.subr.bf16.mxu0 0
    %1079 = vmatpush1.bf16.msra.mxu0 %v981
    %1080 = vmatprep.subr.bf16.mxu0 0
    %1081 = vmatpush1.bf16.msra.mxu0 %v980
    %1082 = vmatprep.subr.bf16.mxu0 0
    %1083 = vmatpush2.bf16.msra.mxu0 0
    %1084 = vmatprep.subr.bf16.mxu0 0
    %1085 = vmatpush2.bf16.msra.mxu0 0
    %1086 = vmatprep.subr.bf16.mxu0 0
    %1087 = vmatpush2.bf16.msra.mxu0 0
    %1088 = vmatprep.subr.bf16.mxu0 0
    %1089 = vmatpush2.bf16.msra.mxu0 0
    %1090 = vmatprep.subr.bf16.mxu0 0
    %1091 = vmatpush2.bf16.msra.mxu0 0
    %1092 = vmatprep.subr.bf16.mxu0 0
    %1093 = vmatpush2.bf16.msra.mxu0 0
    %1094 = vmatprep.subr.bf16.mxu0 0
    %1095 = vmatpush2.bf16.msra.mxu0 0
    %1096 = vmatprep.subr.bf16.mxu0 0
    %1097 = vmatpush2.bf16.msra.mxu0 0
    %1098 = vmatprep.mubr.bf16.mxu0 0
    %1099 = vmatmul.mubr.bf16.gmra.mxu0 %v1064
    %v1100 = vpop.f32.mrf.mxu0
    %v1101 = vadd.f32 0.0, %v1100
    %v1102 = vpop.f32.mrf.mxu0
    %v1103 = vpop.f32.mrf.mxu0
    %v1104 = vpop.f32.mrf.mxu0
    %1105 = vdwg.mxu0
    %v1107 = vrot.slane %v1101, 4
    %v1109 = vadd.f32 %v938, %v1107
    %v1110 = vxor.u32 %v1109, 2147483648
    %v1111 = vmul.f32 %v1110, 1.442695
    %v1112 = vpow.pop %v1111
    %v1113 = vadd.f32 %v1112, 1.0
    %v1114 = vrcp.pop %v1113
    %v1115 = vmul.f32 1.0, %v1114
    %v1116 = vtanh.pop %v1109
    %v1118 = vrot.slane %v1051, 6
    %v1120 = vmul.f32 %v1115, %v1118
    %1122 = vrot.lane.b32.xlu0 %v1116, 64
    %v1123 = vpop.permute.xlu0 %1122
    %v1125 = vmul.f32 %v1115, %v1123
    %1127 = vrot.lane.b32.xlu0 %v1125, 32
    %v1128 = vpop.permute.xlu0 %1127
    %v1130 = vadd.f32 %v1120, %v1128
    %v1131 = vtanh.pop %v1130
    %1133 = vrot.lane.b32.xlu0 %v1131, 64
    %v1134 = vpop.permute.xlu0 %1133
    %v1136 = vmul.f32 %v1115, %v1134
    %v1137 = vpack.c.bf16 %v1136, %v1136
    %v1139 = vrot.slane %v1137, 2
    %1140 = vrot.lane.b32.xlu0 %v1139, 32
    %v1141 = vpop.permute.xlu0 %1140
    %v1143 = vsel %vm803, %v1141, 0
    %1145 = vmatprep.subr.bf16.mxu0 0
    %1146 = vmatpush1.bf16.msra.mxu0 0
    %1147 = vmatprep.subr.bf16.mxu0 0
    %1148 = vmatpush1.bf16.msra.mxu0 0
    %1149 = vmatprep.subr.bf16.mxu0 0
    %1150 = vmatpush1.bf16.msra.mxu0 0
    %1151 = vmatprep.subr.bf16.mxu0 0
    %1152 = vmatpush1.bf16.msra.mxu0 0
    %1153 = vmatprep.subr.bf16.mxu0 0
    %1154 = vmatpush1.bf16.msra.mxu0 0
    %1155 = vmatprep.subr.bf16.mxu0 0
    %1156 = vmatpush1.bf16.msra.mxu0 0
    %1157 = vmatprep.subr.bf16.mxu0 0
    %1158 = vmatpush1.bf16.msra.mxu0 %v981
    %1159 = vmatprep.subr.bf16.mxu0 0
    %1160 = vmatpush1.bf16.msra.mxu0 %v980
    %1161 = vmatprep.subr.bf16.mxu0 0
    %1162 = vmatpush2.bf16.msra.mxu0 0
    %1163 = vmatprep.subr.bf16.mxu0 0
    %1164 = vmatpush2.bf16.msra.mxu0 0
    %1165 = vmatprep.subr.bf16.mxu0 0
    %1166 = vmatpush2.bf16.msra.mxu0 0
    %1167 = vmatprep.subr.bf16.mxu0 0
    %1168 = vmatpush2.bf16.msra.mxu0 0
    %1169 = vmatprep.subr.bf16.mxu0 0
    %1170 = vmatpush2.bf16.msra.mxu0 0
    %1171 = vmatprep.subr.bf16.mxu0 0
    %1172 = vmatpush2.bf16.msra.mxu0 0
    %1173 = vmatprep.subr.bf16.mxu0 0
    %1174 = vmatpush2.bf16.msra.mxu0 0
    %1175 = vmatprep.subr.bf16.mxu0 0
    %1176 = vmatpush2.bf16.msra.mxu0 0
    %1177 = vmatprep.mubr.bf16.mxu0 0
    %1178 = vmatmul.mubr.bf16.gmra.mxu0 %v1143
    %v1179 = vpop.f32.mrf.mxu0
    %v1180 = vadd.f32 0.0, %v1179
    %v1181 = vpop.f32.mrf.mxu0
    %v1182 = vpop.f32.mrf.mxu0
    %v1183 = vpop.f32.mrf.mxu0
    %1184 = vdwg.mxu0
    %v1186 = vrot.slane %v1180, 2
    %v1188 = vadd.f32 %v938, %v1186
    %v1189 = vxor.u32 %v1188, 2147483648
    %v1190 = vmul.f32 %v1189, 1.442695
    %v1191 = vpow.pop %v1190
    %v1192 = vadd.f32 %v1191, 1.0
    %v1193 = vrcp.pop %v1192
    %v1194 = vmul.f32 1.0, %v1193
    %v1195 = vtanh.pop %v1188
    %v1197 = vrot.slane %v1130, 6
    %v1199 = vmul.f32 %v1194, %v1197
    %1201 = vrot.lane.b32.xlu0 %v1195, 64
    %v1202 = vpop.permute.xlu0 %1201
    %v1204 = vmul.f32 %v1194, %v1202
    %1206 = vrot.lane.b32.xlu0 %v1204, 32
    %v1207 = vpop.permute.xlu0 %1206
    %v1209 = vadd.f32 %v1199, %v1207
    %v1210 = vtanh.pop %v1209
    %1212 = vrot.lane.b32.xlu0 %v1210, 64
    %v1213 = vpop.permute.xlu0 %1212
    %v1215 = vmul.f32 %v1194, %v1213
    %v1216 = vpack.c.bf16 %v1215, %v1215
    %v1218 = vrot.slane %v1216, 3
    %1219 = vrot.lane.b32.xlu0 %v1218, 32
    %v1220 = vpop.permute.xlu0 %1219
    %v1222 = vsel %vm803, %v1220, 0
    %1224 = vmatprep.subr.bf16.mxu0 0
    %1225 = vmatpush1.bf16.msra.mxu0 0
    %1226 = vmatprep.subr.bf16.mxu0 0
    %1227 = vmatpush1.bf16.msra.mxu0 0
    %1228 = vmatprep.subr.bf16.mxu0 0
    %1229 = vmatpush1.bf16.msra.mxu0 0
    %1230 = vmatprep.subr.bf16.mxu0 0
    %1231 = vmatpush1.bf16.msra.mxu0 0
    %1232 = vmatprep.subr.bf16.mxu0 0
    %1233 = vmatpush1.bf16.msra.mxu0 0
    %1234 = vmatprep.subr.bf16.mxu0 0
    %1235 = vmatpush1.bf16.msra.mxu0 0
    %1236 = vmatprep.subr.bf16.mxu0 0
    %1237 = vmatpush1.bf16.msra.mxu0 %v981
    %1238 = vmatprep.subr.bf16.mxu0 0
    %1239 = vmatpush1.bf16.msra.mxu0 %v980
    %1240 = vmatprep.subr.bf16.mxu0 0
    %1241 = vmatpush2.bf16.msra.mxu0 0
    %1242 = vmatprep.subr.bf16.mxu0 0
    %1243 = vmatpush2.bf16.msra.mxu0 0
    %1244 = vmatprep.subr.bf16.mxu0 0
    %1245 = vmatpush2.bf16.msra.mxu0 0
    %1246 = vmatprep.subr.bf16.mxu0 0
    %1247 = vmatpush2.bf16.msra.mxu0 0
    %1248 = vmatprep.subr.bf16.mxu0 0
    %1249 = vmatpush2.bf16.msra.mxu0 0
    %1250 = vmatprep.subr.bf16.mxu0 0
    %1251 = vmatpush2.bf16.msra.mxu0 0
    %1252 = vmatprep.subr.bf16.mxu0 0
    %1253 = vmatpush2.bf16.msra.mxu0 0
    %1254 = vmatprep.subr.bf16.mxu0 0
    %1255 = vmatpush2.bf16.msra.mxu0 0
    %1256 = vmatprep.mubr.bf16.mxu0 0
    %1257 = vmatmul.mubr.bf16.gmra.mxu0 %v1222
    %v1258 = vpop.f32.mrf.mxu0
    %v1259 = vadd.f32 0.0, %v1258
    %v1260 = vpop.f32.mrf.mxu0
    %v1261 = vpop.f32.mrf.mxu0
    %v1262 = vpop.f32.mrf.mxu0
    %1263 = vdwg.mxu0
    %v1264 = vadd.f32 %v941, %v1259
    %v1265 = vxor.u32 %v1264, 2147483648
    %v1266 = vmul.f32 %v1265, 1.442695
    %v1267 = vpow.pop %v1266
    %v1268 = vadd.f32 %v1267, 1.0
    %v1269 = vrcp.pop %v1268
    %v1270 = vmul.f32 1.0, %v1269
    %v1271 = vtanh.pop %v1264
    %v1273 = vrot.slane %v1209, 6
    %v1275 = vmul.f32 %v1270, %v1273
    %1277 = vrot.lane.b32.xlu0 %v1271, 64
    %v1278 = vpop.permute.xlu0 %1277
    %v1280 = vmul.f32 %v1270, %v1278
    %1282 = vrot.lane.b32.xlu0 %v1280, 32
    %v1283 = vpop.permute.xlu0 %1282
    %v1285 = vadd.f32 %v1275, %v1283
    %v1286 = vtanh.pop %v1285
    %1288 = vrot.lane.b32.xlu0 %v1286, 64
    %v1289 = vpop.permute.xlu0 %1288
    %v1291 = vmul.f32 %v1270, %v1289
    %v1292 = vpack.c.bf16 %v1291, %v1291
    %1294 = vrot.lane.b32.xlu0 %v1292, 32
    %v1295 = vpop.permute.xlu0 %1294
    %v1297 = vsel %vm803, %v1295, 0
    %1299 = vmatprep.subr.bf16.mxu0 0
    %1300 = vmatpush1.bf16.msra.mxu0 0
    %1301 = vmatprep.subr.bf16.mxu0 0
    %1302 = vmatpush1.bf16.msra.mxu0 0
    %1303 = vmatprep.subr.bf16.mxu0 0
    %1304 = vmatpush1.bf16.msra.mxu0 0
    %1305 = vmatprep.subr.bf16.mxu0 0
    %1306 = vmatpush1.bf16.msra.mxu0 0
    %1307 = vmatprep.subr.bf16.mxu0 0
    %1308 = vmatpush1.bf16.msra.mxu0 0
    %1309 = vmatprep.subr.bf16.mxu0 0
    %1310 = vmatpush1.bf16.msra.mxu0 0
    %1311 = vmatprep.subr.bf16.mxu0 0
    %1312 = vmatpush1.bf16.msra.mxu0 %v981
    %1313 = vmatprep.subr.bf16.mxu0 0
    %1314 = vmatpush1.bf16.msra.mxu0 %v980
    %1315 = vmatprep.subr.bf16.mxu0 0
    %1316 = vmatpush2.bf16.msra.mxu0 0
    %1317 = vmatprep.subr.bf16.mxu0 0
    %1318 = vmatpush2.bf16.msra.mxu0 0
    %1319 = vmatprep.subr.bf16.mxu0 0
    %1320 = vmatpush2.bf16.msra.mxu0 0
    %1321 = vmatprep.subr.bf16.mxu0 0
    %1322 = vmatpush2.bf16.msra.mxu0 0
    %1323 = vmatprep.subr.bf16.mxu0 0
    %1324 = vmatpush2.bf16.msra.mxu0 0
    %1325 = vmatprep.subr.bf16.mxu0 0
    %1326 = vmatpush2.bf16.msra.mxu0 0
    %1327 = vmatprep.subr.bf16.mxu0 0
    %1328 = vmatpush2.bf16.msra.mxu0 0
    %1329 = vmatprep.subr.bf16.mxu0 0
    %1330 = vmatpush2.bf16.msra.mxu0 0
    %1331 = vmatprep.mubr.bf16.mxu0 0
    %1332 = vmatmul.mubr.bf16.gmra.mxu0 %v1297
    %v1333 = vpop.f32.mrf.mxu0
    %v1334 = vadd.f32 0.0, %v1333
    %v1335 = vpop.f32.mrf.mxu0
    %v1336 = vpop.f32.mrf.mxu0
    %v1337 = vpop.f32.mrf.mxu0
    %1338 = vdwg.mxu0
    %v1340 = vrot.slane %v1334, 6
    %v1342 = vadd.f32 %v941, %v1340
    %v1343 = vxor.u32 %v1342, 2147483648
    %v1344 = vmul.f32 %v1343, 1.442695
    %v1345 = vpow.pop %v1344
    %v1346 = vadd.f32 %v1345, 1.0
    %v1347 = vrcp.pop %v1346
    %v1348 = vmul.f32 1.0, %v1347
    %v1349 = vtanh.pop %v1342
    %v1351 = vrot.slane %v1285, 6
    %v1353 = vmul.f32 %v1348, %v1351
    %1355 = vrot.lane.b32.xlu0 %v1349, 64
    %v1356 = vpop.permute.xlu0 %1355
    %v1358 = vmul.f32 %v1348, %v1356
    %1360 = vrot.lane.b32.xlu0 %v1358, 32
    %v1361 = vpop.permute.xlu0 %1360
    %v1363 = vadd.f32 %v1353, %v1361
    %v1364 = vtanh.pop %v1363
    %1366 = vrot.lane.b32.xlu0 %v1364, 64
    %v1367 = vpop.permute.xlu0 %1366
    %v1369 = vmul.f32 %v1348, %v1367
    %v1370 = vpack.c.bf16 %v1369, %v1369
    %v1372 = vrot.slane %v1370, 1
    %1373 = vrot.lane.b32.xlu0 %v1372, 32
    %v1374 = vpop.permute.xlu0 %1373
    %v1376 = vsel %vm803, %v1374, 0
    %1378 = vmatprep.subr.bf16.mxu0 0
    %1379 = vmatpush1.bf16.msra.mxu0 0
    %1380 = vmatprep.subr.bf16.mxu0 0
    %1381 = vmatpush1.bf16.msra.mxu0 0
    %1382 = vmatprep.subr.bf16.mxu0 0
    %1383 = vmatpush1.bf16.msra.mxu0 0
    %1384 = vmatprep.subr.bf16.mxu0 0
    %1385 = vmatpush1.bf16.msra.mxu0 0
    %1386 = vmatprep.subr.bf16.mxu0 0
    %1387 = vmatpush1.bf16.msra.mxu0 0
    %1388 = vmatprep.subr.bf16.mxu0 0
    %1389 = vmatpush1.bf16.msra.mxu0 0
    %1390 = vmatprep.subr.bf16.mxu0 0
    %1391 = vmatpush1.bf16.msra.mxu0 %v981
    %1392 = vmatprep.subr.bf16.mxu0 0
    %1393 = vmatpush1.bf16.msra.mxu0 %v980
    %1394 = vmatprep.subr.bf16.mxu0 0
    %1395 = vmatpush2.bf16.msra.mxu0 0
    %1396 = vmatprep.subr.bf16.mxu0 0
    %1397 = vmatpush2.bf16.msra.mxu0 0
    %1398 = vmatprep.subr.bf16.mxu0 0
    %1399 = vmatpush2.bf16.msra.mxu0 0
    %1400 = vmatprep.subr.bf16.mxu0 0
    %1401 = vmatpush2.bf16.msra.mxu0 0
    %1402 = vmatprep.subr.bf16.mxu0 0
    %1403 = vmatpush2.bf16.msra.mxu0 0
    %1404 = vmatprep.subr.bf16.mxu0 0
    %1405 = vmatpush2.bf16.msra.mxu0 0
    %1406 = vmatprep.subr.bf16.mxu0 0
    %1407 = vmatpush2.bf16.msra.mxu0 0
    %1408 = vmatprep.subr.bf16.mxu0 0
    %1409 = vmatpush2.bf16.msra.mxu0 0
    %1410 = vmatprep.mubr.bf16.mxu0 0
    %1411 = vmatmul.mubr.bf16.gmra.mxu0 %v1376
    %v1412 = vpop.f32.mrf.mxu0
    %v1413 = vadd.f32 0.0, %v1412
    %v1414 = vpop.f32.mrf.mxu0
    %v1415 = vpop.f32.mrf.mxu0
    %v1416 = vpop.f32.mrf.mxu0
    %1417 = vdwg.mxu0
    %v1419 = vrot.slane %v1413, 4
    %v1421 = vadd.f32 %v941, %v1419
    %v1422 = vxor.u32 %v1421, 2147483648
    %v1423 = vmul.f32 %v1422, 1.442695
    %v1424 = vpow.pop %v1423
    %v1425 = vadd.f32 %v1424, 1.0
    %v1426 = vrcp.pop %v1425
    %v1427 = vmul.f32 1.0, %v1426
    %v1428 = vtanh.pop %v1421
    %v1430 = vrot.slane %v1363, 6
    %v1432 = vmul.f32 %v1427, %v1430
    %1434 = vrot.lane.b32.xlu0 %v1428, 64
    %v1435 = vpop.permute.xlu0 %1434
    %v1437 = vmul.f32 %v1427, %v1435
    %1439 = vrot.lane.b32.xlu0 %v1437, 32
    %v1440 = vpop.permute.xlu0 %1439
    %v1442 = vadd.f32 %v1432, %v1440
    %v1443 = vtanh.pop %v1442
    %1445 = vrot.lane.b32.xlu0 %v1443, 64
    %v1446 = vpop.permute.xlu0 %1445
    %v1448 = vmul.f32 %v1427, %v1446
    %v1449 = vpack.c.bf16 %v1448, %v1448
    %v1451 = vrot.slane %v1449, 2
    %1452 = vrot.lane.b32.xlu0 %v1451, 32
    %v1453 = vpop.permute.xlu0 %1452
    %v1455 = vsel %vm803, %v1453, 0
    %1457 = vmatprep.subr.bf16.mxu0 0
    %1458 = vmatpush1.bf16.msra.mxu0 0
    %1459 = vmatprep.subr.bf16.mxu0 0
    %1460 = vmatpush1.bf16.msra.mxu0 0
    %1461 = vmatprep.subr.bf16.mxu0 0
    %1462 = vmatpush1.bf16.msra.mxu0 0
    %1463 = vmatprep.subr.bf16.mxu0 0
    %1464 = vmatpush1.bf16.msra.mxu0 0
    %1465 = vmatprep.subr.bf16.mxu0 0
    %1466 = vmatpush1.bf16.msra.mxu0 0
    %1467 = vmatprep.subr.bf16.mxu0 0
    %1468 = vmatpush1.bf16.msra.mxu0 0
    %1469 = vmatprep.subr.bf16.mxu0 0
    %1470 = vmatpush1.bf16.msra.mxu0 %v981
    %1471 = vmatprep.subr.bf16.mxu0 0
    %1472 = vmatpush1.bf16.msra.mxu0 %v980
    %1473 = vmatprep.subr.bf16.mxu0 0
    %1474 = vmatpush2.bf16.msra.mxu0 0
    %1475 = vmatprep.subr.bf16.mxu0 0
    %1476 = vmatpush2.bf16.msra.mxu0 0
    %1477 = vmatprep.subr.bf16.mxu0 0
    %1478 = vmatpush2.bf16.msra.mxu0 0
    %1479 = vmatprep.subr.bf16.mxu0 0
    %1480 = vmatpush2.bf16.msra.mxu0 0
    %1481 = vmatprep.subr.bf16.mxu0 0
    %1482 = vmatpush2.bf16.msra.mxu0 0
    %1483 = vmatprep.subr.bf16.mxu0 0
    %1484 = vmatpush2.bf16.msra.mxu0 0
    %1485 = vmatprep.subr.bf16.mxu0 0
    %1486 = vmatpush2.bf16.msra.mxu0 0
    %1487 = vmatprep.subr.bf16.mxu0 0
    %1488 = vmatpush2.bf16.msra.mxu0 0
    %1489 = vmatprep.mubr.bf16.mxu0 0
    %1490 = vmatmul.mubr.bf16.gmra.mxu0 %v1455
    %v1491 = vpop.f32.mrf.mxu0
    %v1492 = vadd.f32 0.0, %v1491
    %v1493 = vpop.f32.mrf.mxu0
    %v1494 = vpop.f32.mrf.mxu0
    %v1495 = vpop.f32.mrf.mxu0
    %1496 = vdwg.mxu0
    %v1498 = vrot.slane %v1492, 2
    %v1500 = vadd.f32 %v941, %v1498
    %v1501 = vxor.u32 %v1500, 2147483648
    %v1502 = vmul.f32 %v1501, 1.442695
    %v1503 = vpow.pop %v1502
    %v1504 = vadd.f32 %v1503, 1.0
    %v1505 = vrcp.pop %v1504
    %v1506 = vmul.f32 1.0, %v1505
    %v1507 = vtanh.pop %v1500
    %v1509 = vrot.slane %v1442, 6
    %v1511 = vmul.f32 %v1506, %v1509
    %1513 = vrot.lane.b32.xlu0 %v1507, 64
    %v1514 = vpop.permute.xlu0 %1513
    %v1516 = vmul.f32 %v1506, %v1514
    %1518 = vrot.lane.b32.xlu0 %v1516, 32
    %v1519 = vpop.permute.xlu0 %1518
    %v1521 = vadd.f32 %v1511, %v1519
    %v1522 = vtanh.pop %v1521
    %1524 = vrot.lane.b32.xlu0 %v1522, 64
    %v1525 = vpop.permute.xlu0 %1524
    %v1527 = vmul.f32 %v1506, %v1525
    %v1529 = vrot.slane %v875, 7
    %v1538 = vunpack.c.l.b16 %v68
    %v1539 = vunpack.c.l.b16 %v69
    %v1540 = vunpack.c.l.b16 %v70
    %v1541 = vunpack.c.l.b16 %v71
    %v1542 = vunpack.c.l.b16 %v72
    %v1543 = vunpack.c.l.b16 %v73
    %v1544 = vunpack.c.l.b16 %v74
    %v1545 = vunpack.c.l.b16 %v75
    %v1546 = vpack.c.b16 %v1539, %v1538
    %v1547 = vpack.c.b16 %v1541, %v1540
    %v1548 = vpack.c.b16 %v1543, %v1542
    %v1549 = vpack.c.b16 %v1545, %v1544
    %v1555 = vsel %vm231, %v1529, 0
    %1557 = vmatprep.subr.bf16.mxu0 0
    %1558 = vmatpush1.bf16.msra.mxu0 0
    %1559 = vmatprep.subr.bf16.mxu0 0
    %1560 = vmatpush1.bf16.msra.mxu0 0
    %1561 = vmatprep.subr.bf16.mxu0 0
    %1562 = vmatpush1.bf16.msra.mxu0 0
    %1563 = vmatprep.subr.bf16.mxu0 0
    %1564 = vmatpush1.bf16.msra.mxu0 0
    %1565 = vmatprep.subr.bf16.mxu0 0
    %1566 = vmatpush1.bf16.msra.mxu0 %v1549
    %1567 = vmatprep.subr.bf16.mxu0 0
    %1568 = vmatpush1.bf16.msra.mxu0 %v1548
    %1569 = vmatprep.subr.bf16.mxu0 0
    %1570 = vmatpush1.bf16.msra.mxu0 %v1547
    %1571 = vmatprep.subr.bf16.mxu0 0
    %1572 = vmatpush1.bf16.msra.mxu0 %v1546
    %1573 = vmatprep.subr.bf16.mxu0 0
    %1574 = vmatpush2.bf16.msra.mxu0 0
    %1575 = vmatprep.subr.bf16.mxu0 0
    %1576 = vmatpush2.bf16.msra.mxu0 0
    %1577 = vmatprep.subr.bf16.mxu0 0
    %1578 = vmatpush2.bf16.msra.mxu0 0
    %1579 = vmatprep.subr.bf16.mxu0 0
    %1580 = vmatpush2.bf16.msra.mxu0 0
    %1581 = vmatprep.subr.bf16.mxu0 0
    %1582 = vmatpush2.bf16.msra.mxu0 0
    %1583 = vmatprep.subr.bf16.mxu0 0
    %1584 = vmatpush2.bf16.msra.mxu0 0
    %1585 = vmatprep.subr.bf16.mxu0 0
    %1586 = vmatpush2.bf16.msra.mxu0 0
    %1587 = vmatprep.subr.bf16.mxu0 0
    %1588 = vmatpush2.bf16.msra.mxu0 0
    %1589 = vmatprep.mubr.bf16.mxu0 0
    %1590 = vmatmul.mubr.bf16.gmra.mxu0 %v1555
    %v1591 = vpop.f32.mrf.mxu0
    %v1592 = vadd.f32 %v86, %v1591
    %v1593 = vpop.f32.mrf.mxu0
    %v1594 = vpop.f32.mrf.mxu0
    %v1595 = vpop.f32.mrf.mxu0
    %1596 = vdwg.mxu0
    %v1597 = vxor.u32 %v1592, 2147483648
    %v1598 = vmul.f32 %v1597, 1.442695
    %v1599 = vpow.pop %v1598
    %v1600 = vadd.f32 %v1599, 1.0
    %v1601 = vrcp.pop %v1600
    %v1602 = vmul.f32 1.0, %v1601
    %v1603 = vtanh.pop %v1592
    %v1604 = vmul.f32 %v1602, 0.0
    %1606 = vrot.lane.b32.xlu0 %v1603, 64
    %v1607 = vpop.permute.xlu0 %1606
    %v1609 = vmul.f32 %v1602, %v1607
    %1611 = vrot.lane.b32.xlu0 %v1609, 32
    %v1612 = vpop.permute.xlu0 %1611
    %v1614 = vadd.f32 %v1604, %v1612
    %v1615 = vtanh.pop %v1614
    %1617 = vrot.lane.b32.xlu0 %v1615, 64
    %v1618 = vpop.permute.xlu0 %1617
    %v1620 = vmul.f32 %v1602, %v1618
    %1622 = vrot.lane.b32.xlu0 %v1527, 32
    %v1623 = vpop.permute.xlu0 %1622
    %v1626 = vrot.slane %v1620, 2
    %1627 = vrot.lane.b32.xlu0 %v1626, 64
    %v1628 = vpop.permute.xlu0 %1627
    %v1630 = vsel %vm803, %v1623, %v1628
    %v1631 = vpack.c.bf16 %v1630, %v1630
    %v1633 = vrot.slane %v1631, 3
    %v1642 = vunpack.c.l.b16 %v76
    %v1643 = vunpack.c.l.b16 %v77
    %v1644 = vunpack.c.l.b16 %v78
    %v1645 = vunpack.c.l.b16 %v79
    %v1646 = vunpack.c.l.b16 %v80
    %v1647 = vunpack.c.l.b16 %v81
    %v1648 = vunpack.c.l.b16 %v82
    %v1649 = vunpack.c.l.b16 %v83
    %v1650 = vpack.c.b16 %v1643, %v1642
    %v1651 = vpack.c.b16 %v1645, %v1644
    %v1652 = vpack.c.b16 %v1647, %v1646
    %v1653 = vpack.c.b16 %v1649, %v1648
    %v1659 = vsel %vm231, %v1633, 0
    %1661 = vmatprep.subr.bf16.mxu0 0
    %1662 = vmatpush1.bf16.msra.mxu0 0
    %1663 = vmatprep.subr.bf16.mxu0 0
    %1664 = vmatpush1.bf16.msra.mxu0 0
    %1665 = vmatprep.subr.bf16.mxu0 0
    %1666 = vmatpush1.bf16.msra.mxu0 0
    %1667 = vmatprep.subr.bf16.mxu0 0
    %1668 = vmatpush1.bf16.msra.mxu0 0
    %1669 = vmatprep.subr.bf16.mxu0 0
    %1670 = vmatpush1.bf16.msra.mxu0 %v1653
    %1671 = vmatprep.subr.bf16.mxu0 0
    %1672 = vmatpush1.bf16.msra.mxu0 %v1652
    %1673 = vmatprep.subr.bf16.mxu0 0
    %1674 = vmatpush1.bf16.msra.mxu0 %v1651
    %1675 = vmatprep.subr.bf16.mxu0 0
    %1676 = vmatpush1.bf16.msra.mxu0 %v1650
    %1677 = vmatprep.subr.bf16.mxu0 0
    %1678 = vmatpush2.bf16.msra.mxu0 0
    %1679 = vmatprep.subr.bf16.mxu0 0
    %1680 = vmatpush2.bf16.msra.mxu0 0
    %1681 = vmatprep.subr.bf16.mxu0 0
    %1682 = vmatpush2.bf16.msra.mxu0 0
    %1683 = vmatprep.subr.bf16.mxu0 0
    %1684 = vmatpush2.bf16.msra.mxu0 0
    %1685 = vmatprep.subr.bf16.mxu0 0
    %1686 = vmatpush2.bf16.msra.mxu0 0
    %1687 = vmatprep.subr.bf16.mxu0 0
    %1688 = vmatpush2.bf16.msra.mxu0 0
    %1689 = vmatprep.subr.bf16.mxu0 0
    %1690 = vmatpush2.bf16.msra.mxu0 0
    %1691 = vmatprep.subr.bf16.mxu0 0
    %1692 = vmatpush2.bf16.msra.mxu0 0
    %1693 = vmatprep.mubr.bf16.mxu0 0
    %1694 = vmatmul.mubr.bf16.gmra.mxu0 %v1659
    %v1695 = vpop.f32.mrf.mxu0
    %v1696 = vadd.f32 %v87, %v1695
    %v1697 = vpop.f32.mrf.mxu0
    %v1698 = vpop.f32.mrf.mxu0
    %v1699 = vpop.f32.mrf.mxu0
    %1700 = vdwg.mxu0
    %vm1701 = vcmask 74752
    %1702 = vst.msk [vmem:[#allocation7] sm:$0x3] %vm1701, %v1696
    // Predicated region
    $region26: #{tpu_custom_call.1} parent=1 // pred_check
      _
    $region27: #{tpu_custom_call.1} parent=1 // pred_check_branch
      %1704 = sbr.rel (0) target = $region29
    $region28: #{tpu_custom_call.1} parent=1 // pred_region
      %s1706 = ssub.s32 32, 32
      %1707 = vsyncadd [#allocation4], %s1706
      %s1709 = sshll.u32 [#allocation7], 4
      %s1710 = int_to_ptr.vmem [resolvable:$true] %s1709
      %1712 = dma.vmem_to_hbm [thread:$0]  %s1710, 32, %s4, [#allocation4]
    $region29: #{tpu_custom_call.1} parent=1 // pred_fallthru
      _
    // Predicated region
    $region30: #{tpu_custom_call.1} parent=1 // pred_check
      _
    $region31: #{tpu_custom_call.1} parent=1 // pred_check_branch
      %1714 = sbr.rel (0) target = $region33
    $region32: #{tpu_custom_call.1} parent=1 // pred_region
      %1715 = dma.done [#allocation4], 32
    $region33: #{tpu_custom_call.1} parent=1 // pred_fallthru
      _
    %1716 = vsyncpa [#allocation3], 1
    %1717 = vsyncpa [#allocation6], 1
    %1718 = vsyncpa [#allocation4], 1

</llo_original>
